<compile_context>
chip_gen: v7x
topology: tpu7x:2x2x1
jax: 0.10.0
libtpu: 0.0.40
codegen_flags: <defaults>
</compile_context>

<pallas_src>
import numpy as np
import jax
import jax.numpy as jnp
from jax.experimental import pallas as pl
from jax.experimental.pallas import tpu as pltpu

# Keep both the Pallas kernel and the pure-JAX reference at full f32 matmul
# precision so the 1e-3 tolerance is meaningful.
jax.config.update("jax_default_matmul_precision", "highest")

EPS = 1e-3
NEG = -1e30  # additive mask value for invalid maxpool taps


# ------------------------------ fused kernel ------------------------------- #

def _make_inception_kernel(W, Mb, cmid_pad, cin_pad):
    """Fused Inception kernel for a fixed spatial size / lane width Mb."""
    taps = [(dh, dw) for dh in (-1, 0, 1) for dw in (-1, 0, 1)]
    pool_off = 9 * cmid_pad
    rawx_off = pool_off + cin_pad

    def kernel(x_ref, w1_ref, b1_ref, w2_ref, b2_ref, mmul_ref, mbias_ref,
               o_ref, rhs_ref):
        # x_ref    : (1, cin_pad, Mb)     Bb images stacked along the lane axis
        # w1_ref   : (cmid_pad, cin_pad)  fused reduce-1x1 weights (BN folded)
        # b1_ref   : (cmid_pad, 1)
        # w2_ref   : (ctot, K2)           fused [b1 | b2 | b3 | b4] weights
        # b2_ref   : (ctot, 1)
        # mmul_ref : (9, 1, Mb)           0/1 validity mask per 3x3 tap
        # mbias_ref: (9, 1, Mb)           0/-1e30 additive maxpool mask per tap
        # o_ref    : (1, ctot, Mb)        concatenated branch outputs
        # rhs_ref  : (K2, Mb)             VMEM scratch for the im2col RHS
        x = x_ref[0]                                          # (cin_pad, Mb)

        # ---- stage 1: branch2/branch3 reduce 1x1 convs in one MXU push ------
        mid = jnp.dot(w1_ref[...], x, preferred_element_type=jnp.float32)
        mid = jnp.maximum(mid + b1_ref[...], 0.0)             # (cmid_pad, Mb)

        # ---- stage 2: im2col RHS via lane rolls + masks into aligned scratch
        pooled = x                                            # centre maxpool tap
        for t, (dh, dw) in enumerate(taps):
            s = dh * W + dw
            off = t * cmid_pad
            if s == 0:
                rhs_ref[off:off + cmid_pad, :] = mid
                continue
            shift = (-s) % Mb
            rhs_ref[off:off + cmid_pad, :] = (
                pltpu.roll(mid, shift=shift, axis=1) * mmul_ref[t])
            pooled = jnp.maximum(
                pooled, pltpu.roll(x, shift=shift, axis=1) + mbias_ref[t])
        rhs_ref[pool_off:pool_off + cin_pad, :] = pooled      # branch-4 input
        rhs_ref[rawx_off:rawx_off + cin_pad, :] = x           # branch-1 input

        # ---- one matmul for branch1 (1x1), branch2/3 (3x3) and branch4 ------
        y = jnp.dot(w2_ref[...], rhs_ref[...],
                    preferred_element_type=jnp.float32)       # (ctot, Mb)
        # rows already in concat order -> single aligned, lane-dense store
        o_ref[0, :, :] = jnp.maximum(y + b2_ref[...], 0.0)

    return kernel


# --------------------------- parameter preparation -------------------------- #

def fold_bn(p):
    scale = p['gamma'] / jnp.sqrt(p['var'] + EPS)
    shift = p['beta'] + scale * (p['b'] - p['mean'])
    return scale, shift


def _folded_1x1(p):
    # p['w'] is HWIO (1, 1, cin, cout) -> (cout, cin) with BN scale folded in.
    scale, shift = fold_bn(p)
    return p['w'][0, 0].T * scale[:, None], shift


def _make_masks(H, W, Bb):
    """Per-tap spatial validity masks, tiled over Bb lane-stacked images."""
    M = H * W
    idx = np.arange(M)
    row, col = idx // W, idx % W
    mul = np.zeros((9, M), np.float32)
    bias = np.full((9, M), NEG, np.float32)
    t = 0
    for dh in (-1, 0, 1):
        for dw in (-1, 0, 1):
            ok = ((row + dh >= 0) & (row + dh < H) &
                  (col + dw >= 0) & (col + dw < W))
            mul[t, ok] = 1.0
            bias[t, ok] = 0.0
            t += 1
    mul = np.tile(mul, (1, Bb))[:, None, :]     # (9, 1, Bb*M)
    bias = np.tile(bias, (1, Bb))[:, None, :]
    return jnp.asarray(mul), jnp.asarray(bias)


def _pick_batch_per_block(N, M, max_lanes=2048):
    """Largest Bb dividing N with Bb*M <= max_lanes, keeping >=2 grid steps
    whenever N >= 2 (so both v7x TensorCores get work)."""
    best = 1
    for bb in range(1, N + 1):
        if N % bb:
            continue
        if bb * M > max_lanes:
            continue
        if N >= 2 and N // bb < 2:
            continue
        best = bb
    return best


# ----------------------------- Inception forward ---------------------------- #

def inception_forward(x_nchw, params, *, batch_per_block=None):
    N, cin, H, W = x_nchw.shape
    M = H * W
    f32 = jnp.float32

    ch1x1  = params['b1']['w'].shape[-1]
    ch3x3r = params['b2a']['w'].shape[-1]
    ch3x3  = params['b2b']['w'].shape[-1]
    ch5x5r = params['b3a']['w'].shape[-1]
    ch5x5  = params['b3b']['w'].shape[-1]
    poolp  = params['b4']['w'].shape[-1]

    cmid = ch3x3r + ch5x5r
    cmid_pad = max(8, ((cmid + 7) // 8) * 8)   # 8-aligned im2col chunks
    cin_pad  = max(8, ((cin + 7) // 8) * 8)    # 8-aligned x / pooled chunks
    ctot = ch1x1 + ch3x3 + ch5x5 + poolp
    K2 = 9 * cmid_pad + 2 * cin_pad            # [9 taps | pooled x | raw x]
    pool_off = 9 * cmid_pad
    rawx_off = pool_off + cin_pad

    Bb = batch_per_block or _pick_batch_per_block(N, M)
    assert N % Bb == 0
    G = N // Bb
    Mb = Bb * M

    # ---- stage-1 fused reduce weights: rows = [b2-reduce | b3-reduce | pad] --
    w2a, t2a = _folded_1x1(params['b2a'])
    w3a, t3a = _folded_1x1(params['b3a'])
    w_s1 = jnp.zeros((cmid_pad, cin_pad), f32)
    w_s1 = w_s1.at[:ch3x3r, :cin].set(w2a)
    w_s1 = w_s1.at[ch3x3r:cmid, :cin].set(w3a)
    b_s1 = (jnp.zeros((cmid_pad,), f32)
            .at[:ch3x3r].set(t2a)
            .at[ch3x3r:cmid].set(t3a))[:, None]

    # ---- stage-2 fused weights, rows in concat order [b1 | b2 | b3 | b4] -----
    w1,  t1  = _folded_1x1(params['b1'])
    w4,  t4  = _folded_1x1(params['b4'])
    s2b, t2b = fold_bn(params['b2b'])
    s3b, t3b = fold_bn(params['b3b'])
    w2b = params['b2b']['w'] * s2b             # (3,3,ch3x3r,ch3x3), scale on cout
    w3b = params['b3b']['w'] * s3b             # (3,3,ch5x5r,ch5x5)
    r1, r2, r3 = ch1x1, ch1x1 + ch3x3, ch1x1 + ch3x3 + ch5x5
    w_s2 = jnp.zeros((ctot, K2), f32)
    w_s2 = w_s2.at[:r1, rawx_off:rawx_off + cin].set(w1)          # branch1 1x1
    for kh in range(3):
        for kw in range(3):
            off = (kh * 3 + kw) * cmid_pad
            w_s2 = w_s2.at[r1:r2, off:off + ch3x3r].set(w2b[kh, kw].T)
            w_s2 = w_s2.at[r2:r3, off + ch3x3r:off + cmid].set(w3b[kh, kw].T)
    w_s2 = w_s2.at[r3:, pool_off:pool_off + cin].set(w4)          # pool-proj 1x1
    b_s2 = jnp.concatenate([t1, t2b, t3b, t4])[:, None]

    # ---- per-tap validity masks (constants of H, W), tiled over Bb images ----
    mask_mul, mask_bias = _make_masks(H, W, Bb)

    # ---- layout: (N,cin,H,W) -> (G, cin_pad, Bb*M); batch on the lane axis ---
    x_flat = x_nchw.reshape(N, cin, M).astype(f32)
    x_flat = jnp.pad(x_flat, ((0, 0), (0, cin_pad - cin), (0, 0)))
    x_g = (x_flat.reshape(G, Bb, cin_pad, M)
                 .transpose(0, 2, 1, 3)
                 .reshape(G, cin_pad, Mb))

    kernel = _make_inception_kernel(W, Mb, cmid_pad, cin_pad)
    cost = pl.CostEstimate(
        flops=2 * (cmid_pad * cin_pad + ctot * K2) * M * N,
        transcendentals=0,
        bytes_accessed=4 * (x_g.size + w_s1.size + b_s1.size + w_s2.size
                            + b_s2.size + mask_mul.size + mask_bias.size
                            + N * ctot * M),
    )

    out_g = pl.pallas_call(
        kernel,
        out_shape=jax.ShapeDtypeStruct((G, ctot, Mb), f32),
        grid_spec=pltpu.PrefetchScalarGridSpec(
            num_scalar_prefetch=0,
            grid=(G,),
            in_specs=[
                pl.BlockSpec((1, cin_pad, Mb), lambda g: (g, 0, 0)),
                pl.BlockSpec((cmid_pad, cin_pad), lambda g: (0, 0)),
                pl.BlockSpec((cmid_pad, 1),       lambda g: (0, 0)),
                pl.BlockSpec((ctot, K2),          lambda g: (0, 0)),
                pl.BlockSpec((ctot, 1),           lambda g: (0, 0)),
                pl.BlockSpec((9, 1, Mb),          lambda g: (0, 0, 0)),
                pl.BlockSpec((9, 1, Mb),          lambda g: (0, 0, 0)),
            ],
            out_specs=pl.BlockSpec((1, ctot, Mb), lambda g: (g, 0, 0)),
            scratch_shapes=[pltpu.VMEM((K2, Mb), f32)],
        ),
        compiler_params=pltpu.CompilerParams(
            dimension_semantics=("parallel",),
            vmem_limit_bytes=32 * 1024 * 1024),
        cost_estimate=cost,
    )(x_g, w_s1, b_s1, w_s2, b_s2, mask_mul, mask_bias)

    # ---- back to NCHW (transposes are no-ops when Bb == 1) -------------------
    out = (out_g.reshape(G, ctot, Bb, M)
                 .transpose(0, 2, 1, 3)
                 .reshape(N, ctot, H, W))
    return out


# ------------------------ parameters (synthetic init) ----------------------- #

def make_conv_bn_params(key, cin, cout, ksize):
    k1, k2, k3, k4, k5, k6 = jax.random.split(key, 6)
    return dict(
        w=jax.random.normal(k1, (ksize, ksize, cin, cout), jnp.float32) * 0.1,  # HWIO
        b=jax.random.normal(k2, (cout,), jnp.float32) * 0.05,                   # conv bias
        gamma=1.0 + 0.1 * jax.random.normal(k3, (cout,), jnp.float32),          # BN weight
        beta=0.05 * jax.random.normal(k4, (cout,), jnp.float32),                # BN bias
        mean=0.05 * jax.random.normal(k5, (cout,), jnp.float32),                # running mean
        var=jax.random.uniform(k6, (cout,), jnp.float32, 0.5, 1.5),             # running var
    )


def make_inception_params(key, in_channels, ch1x1, ch3x3red, ch3x3,
                          ch5x5red, ch5x5, pool_proj):
    ks = jax.random.split(key, 6)
    return {
        'b1':  make_conv_bn_params(ks[0], in_channels, ch1x1, 1),
        'b2a': make_conv_bn_params(ks[1], in_channels, ch3x3red, 1),
        'b2b': make_conv_bn_params(ks[2], ch3x3red, ch3x3, 3),
        'b3a': make_conv_bn_params(ks[3], in_channels, ch5x5red, 1),
        'b3b': make_conv_bn_params(ks[4], ch5x5red, ch5x5, 3),   # 3x3, as in the module
        'b4':  make_conv_bn_params(ks[5], in_channels, pool_proj, 1),
    }


# ------------------------------ pure-JAX reference --------------------------- #

def _ref_basicconv(x, p, padding):
    y = jax.lax.conv_general_dilated(
        x, p['w'], (1, 1), padding, dimension_numbers=('NHWC', 'HWIO', 'NHWC'))
    y = y + p['b']
    y = (y - p['mean']) / jnp.sqrt(p['var'] + EPS) * p['gamma'] + p['beta']
    return jnp.maximum(y, 0.0)


def ref_inception(x_nchw, params):
    x = jnp.transpose(x_nchw, (0, 2, 3, 1))
    b1 = _ref_basicconv(x, params['b1'], 'VALID')
    b2 = _ref_basicconv(_ref_basicconv(x, params['b2a'], 'VALID'), params['b2b'], 'SAME')
    b3 = _ref_basicconv(_ref_basicconv(x, params['b3a'], 'VALID'), params['b3b'], 'SAME')
    pooled = jax.lax.reduce_window(
        x, -jnp.inf, jax.lax.max, (1, 3, 3, 1), (1, 1, 1, 1),
        ((0, 0), (1, 1), (1, 1), (0, 0)))
    b4 = _ref_basicconv(pooled, params['b4'], 'VALID')
    out = jnp.concatenate([b1, b2, b3, b4], axis=-1)
    return jnp.transpose(out, (0, 3, 1, 2))


# ----------------------------------- main ----------------------------------- #

if __name__ == "__main__":
    key = jax.random.PRNGKey(0)
    kx, kp = jax.random.split(key)

    # Inception(in_channels=4, ch1x1=4, ch3x3red=4, ch3x3=8, ch5x5red=2, ch5x5=4, pool_proj=4)
    C, H, W = 4, 16, 16
    params = make_inception_params(kp, C, 4, 4, 8, 2, 4, 4)
    fwd = jax.jit(inception_forward)

    # N=2 -> one image per grid step (2 parallel steps); N=4 -> two images
    # stacked on the lane axis per step (exercises the lane-stacking path).
    for N in (2, 4):
        x = jax.random.normal(jax.random.fold_in(kx, N), (N, C, H, W), jnp.float32)
        out = jax.block_until_ready(fwd(x, params))
        ref = jax.block_until_ready(ref_inception(x, params))
        assert out.shape == (N, 4 + 8 + 4 + 4, H, W), out.shape
        np.testing.assert_allclose(np.asarray(out), np.asarray(ref),
                                   rtol=1e-3, atol=1e-3)

    print("KERNEL_OK")
</pallas_src>

<mosaic_0001>
module attributes {stable_mosaic.version = 11 : i64} {
  func.func @kernel(%arg0: i32, %arg1: memref<1x8x256xf32, #tpu.memory_space<vmem>>, %arg2: memref<8x8xf32, #tpu.memory_space<vmem>>, %arg3: memref<8x1xf32, #tpu.memory_space<vmem>>, %arg4: memref<20x88xf32, #tpu.memory_space<vmem>>, %arg5: memref<20x1xf32, #tpu.memory_space<vmem>>, %arg6: memref<9x1x256xf32, #tpu.memory_space<vmem>>, %arg7: memref<9x1x256xf32, #tpu.memory_space<vmem>>, %arg8: memref<1x20x256xf32, #tpu.memory_space<vmem>>, %arg9: memref<88x256xf32, #tpu.memory_space<vmem>>) attributes {dimension_semantics = [#tpu.dimension_semantics<parallel>], iteration_bounds = array<i64: 2>, scalar_prefetch = 0 : i64, scratch_operands = 1 : i64, tpu.core_type = #tpu.core_type<tc>, window_params = [{transform_indices = @transform_0, window_bounds = array<i64: 1, 8, 256>}, {pipeline_mode = #tpu.pipeline_mode<synchronous>, transform_indices = @transform_1, window_bounds = array<i64: 8, 8>}, {pipeline_mode = #tpu.pipeline_mode<synchronous>, transform_indices = @transform_2, window_bounds = array<i64: 8, 1>}, {pipeline_mode = #tpu.pipeline_mode<synchronous>, transform_indices = @transform_3, window_bounds = array<i64: 20, 88>}, {pipeline_mode = #tpu.pipeline_mode<synchronous>, transform_indices = @transform_4, window_bounds = array<i64: 20, 1>}, {pipeline_mode = #tpu.pipeline_mode<synchronous>, transform_indices = @transform_5, window_bounds = array<i64: 9, 1, 256>}, {pipeline_mode = #tpu.pipeline_mode<synchronous>, transform_indices = @transform_6, window_bounds = array<i64: 9, 1, 256>}, {transform_indices = @transform_7, window_bounds = array<i64: 1, 20, 256>}]} {
    %c0 = arith.constant 0 : index
    %c0_0 = arith.constant 0 : index
    %c0_1 = arith.constant 0 : index
    %0 = vector.load %arg1[%c0, %c0_0, %c0_1] : memref<1x8x256xf32, #tpu.memory_space<vmem>>, vector<1x8x256xf32>
    %1 = vector.shape_cast %0 : vector<1x8x256xf32> to vector<8x256xf32>
    %c0_2 = arith.constant 0 : index
    %c0_3 = arith.constant 0 : index
    %2 = vector.load %arg2[%c0_2, %c0_3] : memref<8x8xf32, #tpu.memory_space<vmem>>, vector<8x8xf32>
    %cst = arith.constant dense<0.000000e+00> : vector<8x256xf32>
    %3 = tpu.matmul %2, %1, %cst {dimension_numbers = #tpu.dot_dimension_numbers<[1], [0], [0], [1], [0, 0, 1, 1], [], []>, precision = #tpu.contract_precision<fp32>} : vector<8x8xf32>, vector<8x256xf32>, vector<8x256xf32> -> vector<8x256xf32>
    %c0_4 = arith.constant 0 : index
    %c0_5 = arith.constant 0 : index
    %4 = vector.load %arg3[%c0_4, %c0_5] : memref<8x1xf32, #tpu.memory_space<vmem>>, vector<8x1xf32>
    %5 = vector.broadcast %4 : vector<8x1xf32> to vector<8x256xf32>
    %6 = arith.addf %3, %5 : vector<8x256xf32>
    %cst_6 = arith.constant 0.000000e+00 : f32
    %7 = vector.broadcast %cst_6 : f32 to vector<8x256xf32>
    %8 = arith.maximumf %6, %7 : vector<8x256xf32>
    %c17_i32 = arith.constant 17 : i32
    %9 = tpu.dynamic_rotate %8 by %c17_i32 dim 1 : vector<8x256xf32>, i32 -> vector<8x256xf32>
    %c0_7 = arith.constant 0 : index
    %c0_8 = arith.constant 0 : index
    %c0_9 = arith.constant 0 : index
    %10 = vector.load %arg6[%c0_7, %c0_8, %c0_9] : memref<9x1x256xf32, #tpu.memory_space<vmem>>, vector<1x1x256xf32>
    %11 = vector.shape_cast %10 : vector<1x1x256xf32> to vector<1x256xf32>
    %12 = vector.broadcast %11 : vector<1x256xf32> to vector<8x256xf32>
    %13 = arith.mulf %9, %12 : vector<8x256xf32>
    %c0_10 = arith.constant 0 : index
    %c0_11 = arith.constant 0 : index
    %14 = vector.load %arg9[%c0_10, %c0_11] : memref<88x256xf32, #tpu.memory_space<vmem>>, vector<8x256xf32>
    tpu.vector_store %arg9[%c0_10, %c0_11], %13 {strides = array<i32>} : memref<88x256xf32, #tpu.memory_space<vmem>>, vector<8x256xf32>,
    %c17_i32_12 = arith.constant 17 : i32
    %15 = tpu.dynamic_rotate %1 by %c17_i32_12 dim 1 : vector<8x256xf32>, i32 -> vector<8x256xf32>
    %c0_13 = arith.constant 0 : index
    %c0_14 = arith.constant 0 : index
    %c0_15 = arith.constant 0 : index
    %16 = vector.load %arg7[%c0_13, %c0_14, %c0_15] : memref<9x1x256xf32, #tpu.memory_space<vmem>>, vector<1x1x256xf32>
    %17 = vector.shape_cast %16 : vector<1x1x256xf32> to vector<1x256xf32>
    %18 = vector.broadcast %17 : vector<1x256xf32> to vector<8x256xf32>
    %19 = arith.addf %15, %18 : vector<8x256xf32>
    %20 = arith.maximumf %1, %19 : vector<8x256xf32>
    %c16_i32 = arith.constant 16 : i32
    %21 = tpu.dynamic_rotate %8 by %c16_i32 dim 1 : vector<8x256xf32>, i32 -> vector<8x256xf32>
    %c1 = arith.constant 1 : index
    %c0_16 = arith.constant 0 : index
    %c0_17 = arith.constant 0 : index
    %22 = vector.load %arg6[%c1, %c0_16, %c0_17] : memref<9x1x256xf32, #tpu.memory_space<vmem>>, vector<1x1x256xf32>
    %23 = vector.shape_cast %22 : vector<1x1x256xf32> to vector<1x256xf32>
    %24 = vector.broadcast %23 : vector<1x256xf32> to vector<8x256xf32>
    %25 = arith.mulf %21, %24 : vector<8x256xf32>
    %c8 = arith.constant 8 : index
    %c0_18 = arith.constant 0 : index
    %26 = vector.load %arg9[%c8, %c0_18] : memref<88x256xf32, #tpu.memory_space<vmem>>, vector<8x256xf32>
    tpu.vector_store %arg9[%c8, %c0_18], %25 {strides = array<i32>} : memref<88x256xf32, #tpu.memory_space<vmem>>, vector<8x256xf32>,
    %c16_i32_19 = arith.constant 16 : i32
    %27 = tpu.dynamic_rotate %1 by %c16_i32_19 dim 1 : vector<8x256xf32>, i32 -> vector<8x256xf32>
    %c1_20 = arith.constant 1 : index
    %c0_21 = arith.constant 0 : index
    %c0_22 = arith.constant 0 : index
    %28 = vector.load %arg7[%c1_20, %c0_21, %c0_22] : memref<9x1x256xf32, #tpu.memory_space<vmem>>, vector<1x1x256xf32>
    %29 = vector.shape_cast %28 : vector<1x1x256xf32> to vector<1x256xf32>
    %30 = vector.broadcast %29 : vector<1x256xf32> to vector<8x256xf32>
    %31 = arith.addf %27, %30 : vector<8x256xf32>
    %32 = arith.maximumf %20, %31 : vector<8x256xf32>
    %c15_i32 = arith.constant 15 : i32
    %33 = tpu.dynamic_rotate %8 by %c15_i32 dim 1 : vector<8x256xf32>, i32 -> vector<8x256xf32>
    %c2 = arith.constant 2 : index
    %c0_23 = arith.constant 0 : index
    %c0_24 = arith.constant 0 : index
    %34 = vector.load %arg6[%c2, %c0_23, %c0_24] : memref<9x1x256xf32, #tpu.memory_space<vmem>>, vector<1x1x256xf32>
    %35 = vector.shape_cast %34 : vector<1x1x256xf32> to vector<1x256xf32>
    %36 = vector.broadcast %35 : vector<1x256xf32> to vector<8x256xf32>
    %37 = arith.mulf %33, %36 : vector<8x256xf32>
    %c16 = arith.constant 16 : index
    %c0_25 = arith.constant 0 : index
    %38 = vector.load %arg9[%c16, %c0_25] : memref<88x256xf32, #tpu.memory_space<vmem>>, vector<8x256xf32>
    tpu.vector_store %arg9[%c16, %c0_25], %37 {strides = array<i32>} : memref<88x256xf32, #tpu.memory_space<vmem>>, vector<8x256xf32>,
    %c15_i32_26 = arith.constant 15 : i32
    %39 = tpu.dynamic_rotate %1 by %c15_i32_26 dim 1 : vector<8x256xf32>, i32 -> vector<8x256xf32>
    %c2_27 = arith.constant 2 : index
    %c0_28 = arith.constant 0 : index
    %c0_29 = arith.constant 0 : index
    %40 = vector.load %arg7[%c2_27, %c0_28, %c0_29] : memref<9x1x256xf32, #tpu.memory_space<vmem>>, vector<1x1x256xf32>
    %41 = vector.shape_cast %40 : vector<1x1x256xf32> to vector<1x256xf32>
    %42 = vector.broadcast %41 : vector<1x256xf32> to vector<8x256xf32>
    %43 = arith.addf %39, %42 : vector<8x256xf32>
    %44 = arith.maximumf %32, %43 : vector<8x256xf32>
    %c1_i32 = arith.constant 1 : i32
    %45 = tpu.dynamic_rotate %8 by %c1_i32 dim 1 : vector<8x256xf32>, i32 -> vector<8x256xf32>
    %c3 = arith.constant 3 : index
    %c0_30 = arith.constant 0 : index
    %c0_31 = arith.constant 0 : index
    %46 = vector.load %arg6[%c3, %c0_30, %c0_31] : memref<9x1x256xf32, #tpu.memory_space<vmem>>, vector<1x1x256xf32>
    %47 = vector.shape_cast %46 : vector<1x1x256xf32> to vector<1x256xf32>
    %48 = vector.broadcast %47 : vector<1x256xf32> to vector<8x256xf32>
    %49 = arith.mulf %45, %48 : vector<8x256xf32>
    %c24 = arith.constant 24 : index
    %c0_32 = arith.constant 0 : index
    %50 = vector.load %arg9[%c24, %c0_32] : memref<88x256xf32, #tpu.memory_space<vmem>>, vector<8x256xf32>
    tpu.vector_store %arg9[%c24, %c0_32], %49 {strides = array<i32>} : memref<88x256xf32, #tpu.memory_space<vmem>>, vector<8x256xf32>,
    %c1_i32_33 = arith.constant 1 : i32
    %51 = tpu.dynamic_rotate %1 by %c1_i32_33 dim 1 : vector<8x256xf32>, i32 -> vector<8x256xf32>
    %c3_34 = arith.constant 3 : index
    %c0_35 = arith.constant 0 : index
    %c0_36 = arith.constant 0 : index
    %52 = vector.load %arg7[%c3_34, %c0_35, %c0_36] : memref<9x1x256xf32, #tpu.memory_space<vmem>>, vector<1x1x256xf32>
    %53 = vector.shape_cast %52 : vector<1x1x256xf32> to vector<1x256xf32>
    %54 = vector.broadcast %53 : vector<1x256xf32> to vector<8x256xf32>
    %55 = arith.addf %51, %54 : vector<8x256xf32>
    %56 = arith.maximumf %44, %55 : vector<8x256xf32>
    %c32 = arith.constant 32 : index
    %c0_37 = arith.constant 0 : index
    %57 = vector.load %arg9[%c32, %c0_37] : memref<88x256xf32, #tpu.memory_space<vmem>>, vector<8x256xf32>
    tpu.vector_store %arg9[%c32, %c0_37], %8 {strides = array<i32>} : memref<88x256xf32, #tpu.memory_space<vmem>>, vector<8x256xf32>,
    %c255_i32 = arith.constant 255 : i32
    %58 = tpu.dynamic_rotate %8 by %c255_i32 dim 1 : vector<8x256xf32>, i32 -> vector<8x256xf32>
    %c5 = arith.constant 5 : index
    %c0_38 = arith.constant 0 : index
    %c0_39 = arith.constant 0 : index
    %59 = vector.load %arg6[%c5, %c0_38, %c0_39] : memref<9x1x256xf32, #tpu.memory_space<vmem>>, vector<1x1x256xf32>
    %60 = vector.shape_cast %59 : vector<1x1x256xf32> to vector<1x256xf32>
    %61 = vector.broadcast %60 : vector<1x256xf32> to vector<8x256xf32>
    %62 = arith.mulf %58, %61 : vector<8x256xf32>
    %c40 = arith.constant 40 : index
    %c0_40 = arith.constant 0 : index
    %63 = vector.load %arg9[%c40, %c0_40] : memref<88x256xf32, #tpu.memory_space<vmem>>, vector<8x256xf32>
    tpu.vector_store %arg9[%c40, %c0_40], %62 {strides = array<i32>} : memref<88x256xf32, #tpu.memory_space<vmem>>, vector<8x256xf32>,
    %c255_i32_41 = arith.constant 255 : i32
    %64 = tpu.dynamic_rotate %1 by %c255_i32_41 dim 1 : vector<8x256xf32>, i32 -> vector<8x256xf32>
    %c5_42 = arith.constant 5 : index
    %c0_43 = arith.constant 0 : index
    %c0_44 = arith.constant 0 : index
    %65 = vector.load %arg7[%c5_42, %c0_43, %c0_44] : memref<9x1x256xf32, #tpu.memory_space<vmem>>, vector<1x1x256xf32>
    %66 = vector.shape_cast %65 : vector<1x1x256xf32> to vector<1x256xf32>
    %67 = vector.broadcast %66 : vector<1x256xf32> to vector<8x256xf32>
    %68 = arith.addf %64, %67 : vector<8x256xf32>
    %69 = arith.maximumf %56, %68 : vector<8x256xf32>
    %c241_i32 = arith.constant 241 : i32
    %70 = tpu.dynamic_rotate %8 by %c241_i32 dim 1 : vector<8x256xf32>, i32 -> vector<8x256xf32>
    %c6 = arith.constant 6 : index
    %c0_45 = arith.constant 0 : index
    %c0_46 = arith.constant 0 : index
    %71 = vector.load %arg6[%c6, %c0_45, %c0_46] : memref<9x1x256xf32, #tpu.memory_space<vmem>>, vector<1x1x256xf32>
    %72 = vector.shape_cast %71 : vector<1x1x256xf32> to vector<1x256xf32>
    %73 = vector.broadcast %72 : vector<1x256xf32> to vector<8x256xf32>
    %74 = arith.mulf %70, %73 : vector<8x256xf32>
    %c48 = arith.constant 48 : index
    %c0_47 = arith.constant 0 : index
    %75 = vector.load %arg9[%c48, %c0_47] : memref<88x256xf32, #tpu.memory_space<vmem>>, vector<8x256xf32>
    tpu.vector_store %arg9[%c48, %c0_47], %74 {strides = array<i32>} : memref<88x256xf32, #tpu.memory_space<vmem>>, vector<8x256xf32>,
    %c241_i32_48 = arith.constant 241 : i32
    %76 = tpu.dynamic_rotate %1 by %c241_i32_48 dim 1 : vector<8x256xf32>, i32 -> vector<8x256xf32>
    %c6_49 = arith.constant 6 : index
    %c0_50 = arith.constant 0 : index
    %c0_51 = arith.constant 0 : index
    %77 = vector.load %arg7[%c6_49, %c0_50, %c0_51] : memref<9x1x256xf32, #tpu.memory_space<vmem>>, vector<1x1x256xf32>
    %78 = vector.shape_cast %77 : vector<1x1x256xf32> to vector<1x256xf32>
    %79 = vector.broadcast %78 : vector<1x256xf32> to vector<8x256xf32>
    %80 = arith.addf %76, %79 : vector<8x256xf32>
    %81 = arith.maximumf %69, %80 : vector<8x256xf32>
    %c240_i32 = arith.constant 240 : i32
    %82 = tpu.dynamic_rotate %8 by %c240_i32 dim 1 : vector<8x256xf32>, i32 -> vector<8x256xf32>
    %c7 = arith.constant 7 : index
    %c0_52 = arith.constant 0 : index
    %c0_53 = arith.constant 0 : index
    %83 = vector.load %arg6[%c7, %c0_52, %c0_53] : memref<9x1x256xf32, #tpu.memory_space<vmem>>, vector<1x1x256xf32>
    %84 = vector.shape_cast %83 : vector<1x1x256xf32> to vector<1x256xf32>
    %85 = vector.broadcast %84 : vector<1x256xf32> to vector<8x256xf32>
    %86 = arith.mulf %82, %85 : vector<8x256xf32>
    %c56 = arith.constant 56 : index
    %c0_54 = arith.constant 0 : index
    %87 = vector.load %arg9[%c56, %c0_54] : memref<88x256xf32, #tpu.memory_space<vmem>>, vector<8x256xf32>
    tpu.vector_store %arg9[%c56, %c0_54], %86 {strides = array<i32>} : memref<88x256xf32, #tpu.memory_space<vmem>>, vector<8x256xf32>,
    %c240_i32_55 = arith.constant 240 : i32
    %88 = tpu.dynamic_rotate %1 by %c240_i32_55 dim 1 : vector<8x256xf32>, i32 -> vector<8x256xf32>
    %c7_56 = arith.constant 7 : index
    %c0_57 = arith.constant 0 : index
    %c0_58 = arith.constant 0 : index
    %89 = vector.load %arg7[%c7_56, %c0_57, %c0_58] : memref<9x1x256xf32, #tpu.memory_space<vmem>>, vector<1x1x256xf32>
    %90 = vector.shape_cast %89 : vector<1x1x256xf32> to vector<1x256xf32>
    %91 = vector.broadcast %90 : vector<1x256xf32> to vector<8x256xf32>
    %92 = arith.addf %88, %91 : vector<8x256xf32>
    %93 = arith.maximumf %81, %92 : vector<8x256xf32>
    %c239_i32 = arith.constant 239 : i32
    %94 = tpu.dynamic_rotate %8 by %c239_i32 dim 1 : vector<8x256xf32>, i32 -> vector<8x256xf32>
    %c8_59 = arith.constant 8 : index
    %c0_60 = arith.constant 0 : index
    %c0_61 = arith.constant 0 : index
    %95 = vector.load %arg6[%c8_59, %c0_60, %c0_61] : memref<9x1x256xf32, #tpu.memory_space<vmem>>, vector<1x1x256xf32>
    %96 = vector.shape_cast %95 : vector<1x1x256xf32> to vector<1x256xf32>
    %97 = vector.broadcast %96 : vector<1x256xf32> to vector<8x256xf32>
    %98 = arith.mulf %94, %97 : vector<8x256xf32>
    %c64 = arith.constant 64 : index
    %c0_62 = arith.constant 0 : index
    %99 = vector.load %arg9[%c64, %c0_62] : memref<88x256xf32, #tpu.memory_space<vmem>>, vector<8x256xf32>
    tpu.vector_store %arg9[%c64, %c0_62], %98 {strides = array<i32>} : memref<88x256xf32, #tpu.memory_space<vmem>>, vector<8x256xf32>,
    %c239_i32_63 = arith.constant 239 : i32
    %100 = tpu.dynamic_rotate %1 by %c239_i32_63 dim 1 : vector<8x256xf32>, i32 -> vector<8x256xf32>
    %c8_64 = arith.constant 8 : index
    %c0_65 = arith.constant 0 : index
    %c0_66 = arith.constant 0 : index
    %101 = vector.load %arg7[%c8_64, %c0_65, %c0_66] : memref<9x1x256xf32, #tpu.memory_space<vmem>>, vector<1x1x256xf32>
    %102 = vector.shape_cast %101 : vector<1x1x256xf32> to vector<1x256xf32>
    %103 = vector.broadcast %102 : vector<1x256xf32> to vector<8x256xf32>
    %104 = arith.addf %100, %103 : vector<8x256xf32>
    %105 = arith.maximumf %93, %104 : vector<8x256xf32>
    %c72 = arith.constant 72 : index
    %c0_67 = arith.constant 0 : index
    %106 = vector.load %arg9[%c72, %c0_67] : memref<88x256xf32, #tpu.memory_space<vmem>>, vector<8x256xf32>
    tpu.vector_store %arg9[%c72, %c0_67], %105 {strides = array<i32>} : memref<88x256xf32, #tpu.memory_space<vmem>>, vector<8x256xf32>,
    %c80 = arith.constant 80 : index
    %c0_68 = arith.constant 0 : index
    %107 = vector.load %arg9[%c80, %c0_68] : memref<88x256xf32, #tpu.memory_space<vmem>>, vector<8x256xf32>
    tpu.vector_store %arg9[%c80, %c0_68], %1 {strides = array<i32>} : memref<88x256xf32, #tpu.memory_space<vmem>>, vector<8x256xf32>,
    %c0_69 = arith.constant 0 : index
    %c0_70 = arith.constant 0 : index
    %108 = vector.load %arg4[%c0_69, %c0_70] : memref<20x88xf32, #tpu.memory_space<vmem>>, vector<20x88xf32>
    %c0_71 = arith.constant 0 : index
    %c0_72 = arith.constant 0 : index
    %109 = vector.load %arg9[%c0_71, %c0_72] : memref<88x256xf32, #tpu.memory_space<vmem>>, vector<88x256xf32>
    %cst_73 = arith.constant dense<0.000000e+00> : vector<20x256xf32>
    %110 = tpu.matmul %108, %109, %cst_73 {dimension_numbers = #tpu.dot_dimension_numbers<[1], [0], [0], [1], [0, 0, 1, 1], [], []>, precision = #tpu.contract_precision<fp32>} : vector<20x88xf32>, vector<88x256xf32>, vector<20x256xf32> -> vector<20x256xf32>
    %c0_74 = arith.constant 0 : index
    %c0_75 = arith.constant 0 : index
    %111 = vector.load %arg5[%c0_74, %c0_75] : memref<20x1xf32, #tpu.memory_space<vmem>>, vector<20x1xf32>
    %112 = vector.broadcast %111 : vector<20x1xf32> to vector<20x256xf32>
    %113 = arith.addf %110, %112 : vector<20x256xf32>
    %cst_76 = arith.constant 0.000000e+00 : f32
    %114 = vector.broadcast %cst_76 : f32 to vector<20x256xf32>
    %115 = arith.maximumf %113, %114 : vector<20x256xf32>
    %c0_77 = arith.constant 0 : index
    %c0_78 = arith.constant 0 : index
    %c0_79 = arith.constant 0 : index
    %116 = vector.load %arg8[%c0_77, %c0_78, %c0_79] : memref<1x20x256xf32, #tpu.memory_space<vmem>>, vector<1x20x256xf32>
    %117 = vector.shape_cast %116 : vector<1x20x256xf32> to vector<20x256xf32>
    %118 = vector.shape_cast %115 : vector<20x256xf32> to vector<1x20x256xf32>
    tpu.vector_store %arg8[%c0_77, %c0_78, %c0_79], %118 {strides = array<i32>} : memref<1x20x256xf32, #tpu.memory_space<vmem>>, vector<1x20x256xf32>,
    return
  }
  func.func @transform_0(%arg0: i32) -> (i32, i32, i32) {
    %c0_i32 = arith.constant 0 : i32
    %c0_i32_0 = arith.constant 0 : i32
    %c0_i32_1 = arith.constant 0 : i32
    return %arg0, %c0_i32, %c0_i32_0 : i32, i32, i32
  }
  func.func @transform_1(%arg0: i32) -> (i32, i32) {
    %c0_i32 = arith.constant 0 : i32
    %c0_i32_0 = arith.constant 0 : i32
    %c0_i32_1 = arith.constant 0 : i32
    return %c0_i32, %c0_i32_0 : i32, i32
  }
  func.func @transform_2(%arg0: i32) -> (i32, i32) {
    %c0_i32 = arith.constant 0 : i32
    %c0_i32_0 = arith.constant 0 : i32
    %c0_i32_1 = arith.constant 0 : i32
    return %c0_i32, %c0_i32_0 : i32, i32
  }
  func.func @transform_3(%arg0: i32) -> (i32, i32) {
    %c0_i32 = arith.constant 0 : i32
    %c0_i32_0 = arith.constant 0 : i32
    %c0_i32_1 = arith.constant 0 : i32
    return %c0_i32, %c0_i32_0 : i32, i32
  }
  func.func @transform_4(%arg0: i32) -> (i32, i32) {
    %c0_i32 = arith.constant 0 : i32
    %c0_i32_0 = arith.constant 0 : i32
    %c0_i32_1 = arith.constant 0 : i32
    return %c0_i32, %c0_i32_0 : i32, i32
  }
  func.func @transform_5(%arg0: i32) -> (i32, i32, i32) {
    %c0_i32 = arith.constant 0 : i32
    %c0_i32_0 = arith.constant 0 : i32
    %c0_i32_1 = arith.constant 0 : i32
    %c0_i32_2 = arith.constant 0 : i32
    return %c0_i32, %c0_i32_0, %c0_i32_1 : i32, i32, i32
  }
  func.func @transform_6(%arg0: i32) -> (i32, i32, i32) {
    %c0_i32 = arith.constant 0 : i32
    %c0_i32_0 = arith.constant 0 : i32
    %c0_i32_1 = arith.constant 0 : i32
    %c0_i32_2 = arith.constant 0 : i32
    return %c0_i32, %c0_i32_0, %c0_i32_1 : i32, i32, i32
  }
  func.func @transform_7(%arg0: i32) -> (i32, i32, i32) {
    %c0_i32 = arith.constant 0 : i32
    %c0_i32_0 = arith.constant 0 : i32
    %c0_i32_1 = arith.constant 0 : i32
    return %arg0, %c0_i32, %c0_i32_0 : i32, i32, i32
  }
}

</mosaic_0001>

<llo_original>
// kernel: inception_forward.1
$region0: #{inception_forward.1}
  #allocation0 [shape = 'u32[]', space=smem, size = 0x4, offset = 0x4, fixed_abs, tag = 'smem constant byte address 0x4 - core index']
  #allocation1 [shape = 'u32[144,128]{1,0:T(1,128)}', space=vmem, size = 0x12000, scoped, tag = 'internal scratch']
  #allocation2 [shape = 'f32[88,256]{1,0:T(8,128)}', space=vmem, size = 0x16000, scoped, tag = 'scratch operand']
  %s0 = inlined_call_operand.vmem [shape: f32[2,8,256], index: 0, kind: input, shape index: {}]
  %s1 = inlined_call_operand.vmem [shape: f32[8,8], index: 1, kind: input, shape index: {}]
  %s2 = inlined_call_operand.vmem [shape: f32[8,1], index: 2, kind: input, shape index: {}]
  %s3 = inlined_call_operand.vmem [shape: f32[20,88], index: 3, kind: input, shape index: {}]
  %s4 = inlined_call_operand.vmem [shape: f32[20,1], index: 4, kind: input, shape index: {}]
  %s5 = inlined_call_operand.vmem [shape: f32[9,1,256], index: 5, kind: input, shape index: {}]
  %s6 = inlined_call_operand.vmem [shape: f32[9,1,256], index: 6, kind: input, shape index: {}]
  %s7 = inlined_call_operand.vmem [shape: f32[2,20,256], index: 7, kind: output, shape index: {}]
  %s8 = sld [smem:[#allocation0]]
  $region61: #{inception_forward.1} parent=0
    _
  %s10 = ssub.s32 1, %s8
  %s11 = scalar_select 0, %s10, %s8
  loop: start=0, step=1, limit=4
  $region2: #{inception_forward.1} parent=0 // loop_pre_header
    _
  $region3: #{inception_forward.1} parent=0 // loop_header
    %s13 = sphi 0, %s17
    %p14 = scmp.ge.s32.totalorder %s13, 4
    %s23 = sphi 0, %s25
    %s26 = sphi 0, %s23
    %s27 = sphi 0, %s26
    %s43 = sphi 0, %s27
    %s47 = sphi 0, %s47
    %s49 = sphi 0, %s47
    %s50 = sphi 0, %s49
    %s64 = sphi 0, %s50
    %s68 = sphi 0, %s68
    %s70 = sphi 0, %s68
    %s71 = sphi 0, %s70
    %s85 = sphi 0, %s71
    %s89 = sphi 0, %s89
    %s91 = sphi 0, %s89
    %s92 = sphi 0, %s91
    %s106 = sphi 0, %s92
    %s110 = sphi 0, %s110
    %s112 = sphi 0, %s110
    %s113 = sphi 0, %s112
    %s127 = sphi 0, %s113
    %s131 = sphi 0, %s131
    %s133 = sphi 0, %s131
    %s134 = sphi 0, %s133
    %s148 = sphi 0, %s134
    %s152 = sphi 0, %s152
    %s154 = sphi 0, %s152
    %s155 = sphi 0, %s154
    %s169 = sphi 0, %s155
    %s175 = sphi 0, %s177
    %s178 = sphi 0, %s175
    %s179 = sphi 0, %s178
    %s195 = sphi 0, %s179
  $region4: #{inception_forward.1} parent=0 // loop_header_branch
    %16 = sbr.rel (%p14) target = $region8
  $region5: #{inception_forward.1} parent=0 // loop_body
    %s18 = ssub.s32 %s13, 1
    %s19 = ssub.s32 %s13, 2
    %s20 = sadd.s32 %s13, 1
    %s21 = ssub.s32 %s13, %s20
    %p22 = scmp.eq.s32.totalorder %s21, 0
    %s24 = sadd.s32 %s23, 1
    %s25 = scalar_select %p22, %s23, %s24
    %p28 = pneg %p22
    %p29 = scmp.eq.s32.totalorder %s13, 1
    %p30 = por %p28, %p29
    %p31 = scmp.ne.s32.totalorder %s23, %s26
    %p32 = scmp.eq.s32.totalorder %s13, 0
    %p33 = por %p31, %p32
    %p34 = scmp.ne.s32.totalorder %s23, %s26
    %p35 = scmp.eq.s32.totalorder %s18, 1
    %p36 = por %p34, %p35
    %p37 = scmp.ne.s32.totalorder %s26, %s27
    %p38 = scmp.eq.s32.totalorder %s18, 0
    %p39 = por %p37, %p38
    %p40 = scmp.ne.s32.totalorder %s26, %s27
    %p41 = scmp.eq.s32.totalorder %s19, 1
    %p42 = por %p40, %p41
    %p44 = scmp.ne.s32.totalorder %s27, %s43
    %p45 = scmp.eq.s32.totalorder %s19, 0
    %p46 = por %p44, %p45
    %s48 = sadd.s32 %s47, 1
    %p51 = scmp.eq.s32.totalorder %s13, 1
    %p52 = scmp.ne.s32.totalorder %s47, %s49
    %p53 = scmp.eq.s32.totalorder %s13, 0
    %p54 = por %p52, %p53
    %p55 = scmp.ne.s32.totalorder %s47, %s49
    %p56 = scmp.eq.s32.totalorder %s18, 1
    %p57 = por %p55, %p56
    %p58 = scmp.ne.s32.totalorder %s49, %s50
    %p59 = scmp.eq.s32.totalorder %s18, 0
    %p60 = por %p58, %p59
    %p61 = scmp.ne.s32.totalorder %s49, %s50
    %p62 = scmp.eq.s32.totalorder %s19, 1
    %p63 = por %p61, %p62
    %p65 = scmp.ne.s32.totalorder %s50, %s64
    %p66 = scmp.eq.s32.totalorder %s19, 0
    %p67 = por %p65, %p66
    %s69 = sadd.s32 %s68, 1
    %p72 = scmp.eq.s32.totalorder %s13, 1
    %p73 = scmp.ne.s32.totalorder %s68, %s70
    %p74 = scmp.eq.s32.totalorder %s13, 0
    %p75 = por %p73, %p74
    %p76 = scmp.ne.s32.totalorder %s68, %s70
    %p77 = scmp.eq.s32.totalorder %s18, 1
    %p78 = por %p76, %p77
    %p79 = scmp.ne.s32.totalorder %s70, %s71
    %p80 = scmp.eq.s32.totalorder %s18, 0
    %p81 = por %p79, %p80
    %p82 = scmp.ne.s32.totalorder %s70, %s71
    %p83 = scmp.eq.s32.totalorder %s19, 1
    %p84 = por %p82, %p83
    %p86 = scmp.ne.s32.totalorder %s71, %s85
    %p87 = scmp.eq.s32.totalorder %s19, 0
    %p88 = por %p86, %p87
    %s90 = sadd.s32 %s89, 1
    %p93 = scmp.eq.s32.totalorder %s13, 1
    %p94 = scmp.ne.s32.totalorder %s89, %s91
    %p95 = scmp.eq.s32.totalorder %s13, 0
    %p96 = por %p94, %p95
    %p97 = scmp.ne.s32.totalorder %s89, %s91
    %p98 = scmp.eq.s32.totalorder %s18, 1
    %p99 = por %p97, %p98
    %p100 = scmp.ne.s32.totalorder %s91, %s92
    %p101 = scmp.eq.s32.totalorder %s18, 0
    %p102 = por %p100, %p101
    %p103 = scmp.ne.s32.totalorder %s91, %s92
    %p104 = scmp.eq.s32.totalorder %s19, 1
    %p105 = por %p103, %p104
    %p107 = scmp.ne.s32.totalorder %s92, %s106
    %p108 = scmp.eq.s32.totalorder %s19, 0
    %p109 = por %p107, %p108
    %s111 = sadd.s32 %s110, 1
    %p114 = scmp.eq.s32.totalorder %s13, 1
    %p115 = scmp.ne.s32.totalorder %s110, %s112
    %p116 = scmp.eq.s32.totalorder %s13, 0
    %p117 = por %p115, %p116
    %p118 = scmp.ne.s32.totalorder %s110, %s112
    %p119 = scmp.eq.s32.totalorder %s18, 1
    %p120 = por %p118, %p119
    %p121 = scmp.ne.s32.totalorder %s112, %s113
    %p122 = scmp.eq.s32.totalorder %s18, 0
    %p123 = por %p121, %p122
    %p124 = scmp.ne.s32.totalorder %s112, %s113
    %p125 = scmp.eq.s32.totalorder %s19, 1
    %p126 = por %p124, %p125
    %p128 = scmp.ne.s32.totalorder %s113, %s127
    %p129 = scmp.eq.s32.totalorder %s19, 0
    %p130 = por %p128, %p129
    %s132 = sadd.s32 %s131, 1
    %p135 = scmp.eq.s32.totalorder %s13, 1
    %p136 = scmp.ne.s32.totalorder %s131, %s133
    %p137 = scmp.eq.s32.totalorder %s13, 0
    %p138 = por %p136, %p137
    %p139 = scmp.ne.s32.totalorder %s131, %s133
    %p140 = scmp.eq.s32.totalorder %s18, 1
    %p141 = por %p139, %p140
    %p142 = scmp.ne.s32.totalorder %s133, %s134
    %p143 = scmp.eq.s32.totalorder %s18, 0
    %p144 = por %p142, %p143
    %p145 = scmp.ne.s32.totalorder %s133, %s134
    %p146 = scmp.eq.s32.totalorder %s19, 1
    %p147 = por %p145, %p146
    %p149 = scmp.ne.s32.totalorder %s134, %s148
    %p150 = scmp.eq.s32.totalorder %s19, 0
    %p151 = por %p149, %p150
    %s153 = sadd.s32 %s152, 1
    %p156 = scmp.eq.s32.totalorder %s13, 1
    %p157 = scmp.ne.s32.totalorder %s152, %s154
    %p158 = scmp.eq.s32.totalorder %s13, 0
    %p159 = por %p157, %p158
    %p160 = scmp.ne.s32.totalorder %s152, %s154
    %p161 = scmp.eq.s32.totalorder %s18, 1
    %p162 = por %p160, %p161
    %p163 = scmp.ne.s32.totalorder %s154, %s155
    %p164 = scmp.eq.s32.totalorder %s18, 0
    %p165 = por %p163, %p164
    %p166 = scmp.ne.s32.totalorder %s154, %s155
    %p167 = scmp.eq.s32.totalorder %s19, 1
    %p168 = por %p166, %p167
    %p170 = scmp.ne.s32.totalorder %s155, %s169
    %p171 = scmp.eq.s32.totalorder %s19, 0
    %p172 = por %p170, %p171
    %s173 = ssub.s32 %s13, %s20
    %p174 = scmp.eq.s32.totalorder %s173, 0
    %s176 = sadd.s32 %s175, 1
    %s177 = scalar_select %p174, %s175, %s176
    %p180 = pneg %p174
    %p181 = scmp.eq.s32.totalorder %s13, 1
    %p182 = por %p180, %p181
    %p183 = scmp.ne.s32.totalorder %s175, %s178
    %p184 = scmp.eq.s32.totalorder %s13, 0
    %p185 = por %p183, %p184
    %p186 = scmp.ne.s32.totalorder %s175, %s178
    %p187 = scmp.eq.s32.totalorder %s18, 1
    %p188 = por %p186, %p187
    %p189 = scmp.ne.s32.totalorder %s178, %s179
    %p190 = scmp.eq.s32.totalorder %s18, 0
    %p191 = por %p189, %p190
    %p192 = scmp.ne.s32.totalorder %s178, %s179
    %p193 = scmp.eq.s32.totalorder %s19, 1
    %p194 = por %p192, %p193
    %p196 = scmp.ne.s32.totalorder %s179, %s195
    %p197 = scmp.eq.s32.totalorder %s19, 0
    %p198 = por %p196, %p197
    %p199 = scmp.le.s32.totalorder 1, %s13
    %p200 = scmp.lt.s32.totalorder %s13, 3
    %p201 = pnand %p199, %p200
    %p202 = pneg %p201
    // Predicated region
    $region9: #{inception_forward.1} parent=5 // pred_check
      _
    $region10: #{inception_forward.1} parent=5 // pred_check_branch
      %204 = sbr.rel (%p201) target = $region12
    $region11: #{inception_forward.1} parent=5 // pred_region
      %s205 = ssub.s32 %s13, 1
      // Predicated region
      $region13: #{inception_forward.1} parent=11 // pred_check
        %p206 = pneg %p60
      $region14: #{inception_forward.1} parent=11 // pred_check_branch
        %208 = sbr.rel (%p206) target = $region16
      $region15: #{inception_forward.1} parent=11 // pred_region
        _
      $region16: #{inception_forward.1} parent=11 // pred_fallthru
        _
      // Predicated region
      $region17: #{inception_forward.1} parent=11 // pred_check
        %p209 = pneg %p81
      $region18: #{inception_forward.1} parent=11 // pred_check_branch
        %211 = sbr.rel (%p209) target = $region20
      $region19: #{inception_forward.1} parent=11 // pred_region
        _
      $region20: #{inception_forward.1} parent=11 // pred_fallthru
        _
      // Predicated region
      $region21: #{inception_forward.1} parent=11 // pred_check
        %p212 = pneg %p102
      $region22: #{inception_forward.1} parent=11 // pred_check_branch
        %214 = sbr.rel (%p212) target = $region24
      $region23: #{inception_forward.1} parent=11 // pred_region
        _
      $region24: #{inception_forward.1} parent=11 // pred_fallthru
        _
      // Predicated region
      $region25: #{inception_forward.1} parent=11 // pred_check
        %p215 = pneg %p123
      $region26: #{inception_forward.1} parent=11 // pred_check_branch
        %217 = sbr.rel (%p215) target = $region28
      $region27: #{inception_forward.1} parent=11 // pred_region
        _
      $region28: #{inception_forward.1} parent=11 // pred_fallthru
        _
      // Predicated region
      $region29: #{inception_forward.1} parent=11 // pred_check
        %p218 = pneg %p144
      $region30: #{inception_forward.1} parent=11 // pred_check_branch
        %220 = sbr.rel (%p218) target = $region32
      $region31: #{inception_forward.1} parent=11 // pred_region
        _
      $region32: #{inception_forward.1} parent=11 // pred_fallthru
        _
      // Predicated region
      $region33: #{inception_forward.1} parent=11 // pred_check
        %p221 = pneg %p165
      $region34: #{inception_forward.1} parent=11 // pred_check_branch
        %223 = sbr.rel (%p221) target = $region36
      $region35: #{inception_forward.1} parent=11 // pred_region
        _
      $region36: #{inception_forward.1} parent=11 // pred_fallthru
        _
    $region12: #{inception_forward.1} parent=5 // pred_fallthru
      _
    %p224 = scmp.lt.s32.totalorder %s13, 2
    // Predicated region
    $region37: #{inception_forward.1} parent=5 // pred_check
      %p225 = pneg %p224
    $region38: #{inception_forward.1} parent=5 // pred_check_branch
      %227 = sbr.rel (%p225) target = $region40
    $region39: #{inception_forward.1} parent=5 // pred_region
      // Predicated region
      $region41: #{inception_forward.1} parent=39 // pred_check
        %p228 = pneg %p33
      $region42: #{inception_forward.1} parent=39 // pred_check_branch
        %230 = sbr.rel (%p228) target = $region44
      $region43: #{inception_forward.1} parent=39 // pred_region
        %p231 = scmp.lt.s32.totalorder %s13, 1
        %s232 = scalar_select %p231, %s13, 1
        %s233 = smul.addr %s232, 2
        %s234 = smul.addr %s233, 8
        %s235 = scalar_lea.vmem %s0, %s234
      $region44: #{inception_forward.1} parent=39 // pred_fallthru
        _
    $region40: #{inception_forward.1} parent=5 // pred_fallthru
      _
    %p236 = scmp.le.s32.totalorder 1, %s13
    %p237 = scmp.lt.s32.totalorder %s13, 3
    %p238 = pnand %p236, %p237
    %p239 = pneg %p238
    // Predicated region
    $region45: #{inception_forward.1} parent=5 // pred_check
      _
    $region46: #{inception_forward.1} parent=5 // pred_check_branch
      %241 = sbr.rel (%p238) target = $region48
    $region47: #{inception_forward.1} parent=5 // pred_region
      %s242 = ssub.s32 %s13, 1
      %p243 = scmp.lt.s32.totalorder %s18, 1
      %s244 = scalar_select %p243, %s18, 1
      %s245 = smul.addr %s244, 2
      %s246 = smul.addr %s245, 8
      %s247 = scalar_lea.vmem %s0, %s246
      %p248 = pneg %p39
      %p249 = pneg %p36
      %p250 = pneg %p60
      %p251 = pneg %p57
      %p252 = pneg %p81
      %p253 = pneg %p78
      %p254 = pneg %p102
      %p255 = pneg %p99
      %p256 = pneg %p123
      %p257 = pneg %p120
      %p258 = pneg %p144
      %p259 = pneg %p141
      %p260 = pneg %p165
      %p261 = pneg %p162
      %p262 = pneg %p191
      %p263 = pneg %p188
      %p264 = scmp.lt.s32.totalorder %s18, 1
      %s265 = scalar_select %p264, %s18, 1
      %s266 = smul.addr %s265, 6
      %s267 = smul.addr %s266, 8
      %s268 = scalar_lea.vmem %s7, %s267
      %p269 = scmp.lt.s32.totalorder %s18, 1
      %s270 = scalar_select %p269, %s18, 1
      %s271 = smul.addr %s270, 2
      %s272 = smul.addr %s271, 8
      %s273 = scalar_lea.vmem %s0, %s272
      %p274 = scmp.lt.s32.totalorder %s18, 1
      %s275 = scalar_select %p274, %s18, 1
      %s276 = smul.addr %s275, 6
      %s277 = smul.addr %s276, 8
      %s278 = scalar_lea.vmem %s7, %s277
      %v279 = vld [vmem:[%s273] sm:$0xff]
      %v280 = vld [vmem:[%s273 + $0x8] sm:$0xff]
      %v281 = vld [vmem:[%s1] sm:$0xff]
      %v282 = vld [vmem:[%s2] sm:$0xff]
      %284 = vset.pattern.permute.xlu0 0
      %285 = vperm.xlu0 %284, %v282
      %v286 = vpop.permute.xlu0 %285
      %vm288 = vcmask 64512
      %v290 = vsel %vm288, %v281, 0
      %v292 = vand.u32 %v280, 4294901760
      %293 = vmatprep.subr.mxu0 %v292
      %v294 = vand.u32 %v279, 4294901760
      %295 = vmatpush1.msra.mxu0 %v294
      %296 = vmatprep.subr.mxu0 0.0
      %297 = vmatpush1.msra.mxu0 0.0
      %298 = vmatprep.subr.mxu0 0.0
      %299 = vmatpush1.msra.mxu0 0.0
      %300 = vmatprep.subr.mxu0 0.0
      %301 = vmatpush1.msra.mxu0 0.0
      %302 = vmatprep.subr.mxu0 0.0
      %303 = vmatpush1.msra.mxu0 0.0
      %304 = vmatprep.subr.mxu0 0.0
      %305 = vmatpush1.msra.mxu0 0.0
      %306 = vmatprep.subr.mxu0 0.0
      %307 = vmatpush1.msra.mxu0 0.0
      %308 = vmatprep.subr.mxu0 0.0
      %309 = vmatpush1.msra.mxu0 0.0
      %310 = vmatprep.subr.mxu0 0.0
      %311 = vmatpush1.msra.mxu0 0.0
      %312 = vmatprep.subr.mxu0 0.0
      %313 = vmatpush1.msra.mxu0 0.0
      %314 = vmatprep.subr.mxu0 0.0
      %315 = vmatpush1.msra.mxu0 0.0
      %316 = vmatprep.subr.mxu0 0.0
      %317 = vmatpush1.msra.mxu0 0.0
      %318 = vmatprep.subr.mxu0 0.0
      %319 = vmatpush1.msra.mxu0 0.0
      %320 = vmatprep.subr.mxu0 0.0
      %321 = vmatpush1.msra.mxu0 0.0
      %322 = vmatprep.subr.mxu0 0.0
      %323 = vmatpush1.msra.mxu0 0.0
      %324 = vmatprep.subr.mxu0 0.0
      %325 = vmatpush1.msra.mxu0 0.0
      %326 = vmatprep.subr.mxu0 0.0
      %327 = vmatpush1.msra.mxu0 0.0
      %328 = vmatprep.subr.mxu0 0.0
      %329 = vmatpush1.msra.mxu0 0.0
      %330 = vmatprep.subr.mxu0 0.0
      %331 = vmatpush1.msra.mxu0 0.0
      %332 = vmatprep.subr.mxu0 0.0
      %333 = vmatpush1.msra.mxu0 0.0
      %334 = vmatprep.subr.mxu0 0.0
      %335 = vmatpush1.msra.mxu0 0.0
      %336 = vmatprep.subr.mxu0 0.0
      %337 = vmatpush1.msra.mxu0 0.0
      %338 = vmatprep.subr.mxu0 0.0
      %339 = vmatpush1.msra.mxu0 0.0
      %340 = vmatprep.subr.mxu0 0.0
      %341 = vmatpush1.msra.mxu0 0.0
      %342 = vmatprep.subr.mxu0 0.0
      %343 = vmatpush1.msra.mxu0 0.0
      %344 = vmatprep.subr.mxu0 0.0
      %345 = vmatpush1.msra.mxu0 0.0
      %346 = vmatprep.subr.mxu0 0.0
      %347 = vmatpush1.msra.mxu0 0.0
      %348 = vmatprep.subr.mxu0 0.0
      %349 = vmatpush1.msra.mxu0 0.0
      %350 = vmatprep.subr.mxu0 0.0
      %351 = vmatpush1.msra.mxu0 0.0
      %352 = vmatprep.subr.mxu0 0.0
      %353 = vmatpush1.msra.mxu0 0.0
      %354 = vmatprep.subr.mxu0 0.0
      %355 = vmatpush1.msra.mxu0 0.0
      %356 = vmatprep.subr.mxu0 0.0
      %357 = vmatpush1.msra.mxu0 0.0
      %358 = vmatprep.mubr.f32.mxu0 0.0
      %v359 = vand.u32 %v290, 4294901760
      %v360 = vsub.f32 %v290, %v359
      %v361 = vand.u32 %v360, 4294901760
      %v362 = vsub.f32 %v360, %v361
      %v363 = vand.u32 %v362, 4294901760
      %364 = vmatmul.mubr.f32.gmra.mrb[0].mxu0 %v363
      %v365 = vpop.f32.mrb[0].mxu0
      %v366 = vadd.f32 %v286, %v365
      %v367 = vpop.f32.mrb[0].mxu0
      %v368 = vadd.f32 %v286, %v367
      %369 = vdwg.mxu0
      %v370 = vand.u32 %v280, 4294901760
      %v371 = vsub.f32 %v280, %v370
      %v372 = vand.u32 %v371, 4294901760
      %v373 = vsub.f32 %v371, %v372
      %v374 = vand.u32 %v373, 4294901760
      %375 = vmatprep.subr.mxu0 %v374
      %v376 = vand.u32 %v279, 4294901760
      %v377 = vsub.f32 %v279, %v376
      %v378 = vand.u32 %v377, 4294901760
      %v379 = vsub.f32 %v377, %v378
      %v380 = vand.u32 %v379, 4294901760
      %381 = vmatpush1.msra.mxu0 %v380
      %382 = vmatprep.subr.mxu0 0.0
      %383 = vmatpush1.msra.mxu0 0.0
      %384 = vmatprep.subr.mxu0 0.0
      %385 = vmatpush1.msra.mxu0 0.0
      %386 = vmatprep.subr.mxu0 0.0
      %387 = vmatpush1.msra.mxu0 0.0
      %388 = vmatprep.subr.mxu0 0.0
      %389 = vmatpush1.msra.mxu0 0.0
      %390 = vmatprep.subr.mxu0 0.0
      %391 = vmatpush1.msra.mxu0 0.0
      %392 = vmatprep.subr.mxu0 0.0
      %393 = vmatpush1.msra.mxu0 0.0
      %394 = vmatprep.subr.mxu0 0.0
      %395 = vmatpush1.msra.mxu0 0.0
      %396 = vmatprep.subr.mxu0 0.0
      %397 = vmatpush1.msra.mxu0 0.0
      %398 = vmatprep.subr.mxu0 0.0
      %399 = vmatpush1.msra.mxu0 0.0
      %400 = vmatprep.subr.mxu0 0.0
      %401 = vmatpush1.msra.mxu0 0.0
      %402 = vmatprep.subr.mxu0 0.0
      %403 = vmatpush1.msra.mxu0 0.0
      %404 = vmatprep.subr.mxu0 0.0
      %405 = vmatpush1.msra.mxu0 0.0
      %406 = vmatprep.subr.mxu0 0.0
      %407 = vmatpush1.msra.mxu0 0.0
      %408 = vmatprep.subr.mxu0 0.0
      %409 = vmatpush1.msra.mxu0 0.0
      %410 = vmatprep.subr.mxu0 0.0
      %411 = vmatpush1.msra.mxu0 0.0
      %412 = vmatprep.subr.mxu0 0.0
      %413 = vmatpush1.msra.mxu0 0.0
      %414 = vmatprep.subr.mxu0 0.0
      %415 = vmatpush1.msra.mxu0 0.0
      %416 = vmatprep.subr.mxu0 0.0
      %417 = vmatpush1.msra.mxu0 0.0
      %418 = vmatprep.subr.mxu0 0.0
      %419 = vmatpush1.msra.mxu0 0.0
      %420 = vmatprep.subr.mxu0 0.0
      %421 = vmatpush1.msra.mxu0 0.0
      %422 = vmatprep.subr.mxu0 0.0
      %423 = vmatpush1.msra.mxu0 0.0
      %424 = vmatprep.subr.mxu0 0.0
      %425 = vmatpush1.msra.mxu0 0.0
      %426 = vmatprep.subr.mxu0 0.0
      %427 = vmatpush1.msra.mxu0 0.0
      %428 = vmatprep.subr.mxu0 0.0
      %429 = vmatpush1.msra.mxu0 0.0
      %430 = vmatprep.subr.mxu0 0.0
      %431 = vmatpush1.msra.mxu0 0.0
      %432 = vmatprep.subr.mxu0 0.0
      %433 = vmatpush1.msra.mxu0 0.0
      %434 = vmatprep.subr.mxu0 0.0
      %435 = vmatpush1.msra.mxu0 0.0
      %436 = vmatprep.subr.mxu0 0.0
      %437 = vmatpush1.msra.mxu0 0.0
      %438 = vmatprep.subr.mxu0 0.0
      %439 = vmatpush1.msra.mxu0 0.0
      %440 = vmatprep.subr.mxu0 0.0
      %441 = vmatpush1.msra.mxu0 0.0
      %442 = vmatprep.subr.mxu0 0.0
      %443 = vmatpush1.msra.mxu0 0.0
      %444 = vmatprep.mubr.f32.mxu0 0.0
      %v445 = vand.u32 %v290, 4294901760
      %446 = vmatmul.mubr.f32.gmra.mrb[0].mxu0 %v445
      %v447 = vpop.f32.mrb[0].mxu0
      %v448 = vadd.f32 %v366, %v447
      %v449 = vpop.f32.mrb[0].mxu0
      %v450 = vadd.f32 %v368, %v449
      %451 = vdwg.mxu0
      %v452 = vand.u32 %v280, 4294901760
      %v453 = vsub.f32 %v280, %v452
      %454 = vmatprep.subr.mxu0 %v453
      %v455 = vand.u32 %v279, 4294901760
      %v456 = vsub.f32 %v279, %v455
      %457 = vmatpush1.msra.mxu0 %v456
      %458 = vmatprep.subr.mxu0 0.0
      %459 = vmatpush1.msra.mxu0 0.0
      %460 = vmatprep.subr.mxu0 0.0
      %461 = vmatpush1.msra.mxu0 0.0
      %462 = vmatprep.subr.mxu0 0.0
      %463 = vmatpush1.msra.mxu0 0.0
      %464 = vmatprep.subr.mxu0 0.0
      %465 = vmatpush1.msra.mxu0 0.0
      %466 = vmatprep.subr.mxu0 0.0
      %467 = vmatpush1.msra.mxu0 0.0
      %468 = vmatprep.subr.mxu0 0.0
      %469 = vmatpush1.msra.mxu0 0.0
      %470 = vmatprep.subr.mxu0 0.0
      %471 = vmatpush1.msra.mxu0 0.0
      %472 = vmatprep.subr.mxu0 0.0
      %473 = vmatpush1.msra.mxu0 0.0
      %474 = vmatprep.subr.mxu0 0.0
      %475 = vmatpush1.msra.mxu0 0.0
      %476 = vmatprep.subr.mxu0 0.0
      %477 = vmatpush1.msra.mxu0 0.0
      %478 = vmatprep.subr.mxu0 0.0
      %479 = vmatpush1.msra.mxu0 0.0
      %480 = vmatprep.subr.mxu0 0.0
      %481 = vmatpush1.msra.mxu0 0.0
      %482 = vmatprep.subr.mxu0 0.0
      %483 = vmatpush1.msra.mxu0 0.0
      %484 = vmatprep.subr.mxu0 0.0
      %485 = vmatpush1.msra.mxu0 0.0
      %486 = vmatprep.subr.mxu0 0.0
      %487 = vmatpush1.msra.mxu0 0.0
      %488 = vmatprep.subr.mxu0 0.0
      %489 = vmatpush1.msra.mxu0 0.0
      %490 = vmatprep.subr.mxu0 0.0
      %491 = vmatpush1.msra.mxu0 0.0
      %492 = vmatprep.subr.mxu0 0.0
      %493 = vmatpush1.msra.mxu0 0.0
      %494 = vmatprep.subr.mxu0 0.0
      %495 = vmatpush1.msra.mxu0 0.0
      %496 = vmatprep.subr.mxu0 0.0
      %497 = vmatpush1.msra.mxu0 0.0
      %498 = vmatprep.subr.mxu0 0.0
      %499 = vmatpush1.msra.mxu0 0.0
      %500 = vmatprep.subr.mxu0 0.0
      %501 = vmatpush1.msra.mxu0 0.0
      %502 = vmatprep.subr.mxu0 0.0
      %503 = vmatpush1.msra.mxu0 0.0
      %504 = vmatprep.subr.mxu0 0.0
      %505 = vmatpush1.msra.mxu0 0.0
      %506 = vmatprep.subr.mxu0 0.0
      %507 = vmatpush1.msra.mxu0 0.0
      %508 = vmatprep.subr.mxu0 0.0
      %509 = vmatpush1.msra.mxu0 0.0
      %510 = vmatprep.subr.mxu0 0.0
      %511 = vmatpush1.msra.mxu0 0.0
      %512 = vmatprep.subr.mxu0 0.0
      %513 = vmatpush1.msra.mxu0 0.0
      %514 = vmatprep.subr.mxu0 0.0
      %515 = vmatpush1.msra.mxu0 0.0
      %516 = vmatprep.subr.mxu0 0.0
      %517 = vmatpush1.msra.mxu0 0.0
      %518 = vmatprep.subr.mxu0 0.0
      %519 = vmatpush1.msra.mxu0 0.0
      %520 = vmatprep.mubr.f32.mxu0 0.0
      %v521 = vand.u32 %v290, 4294901760
      %v522 = vsub.f32 %v290, %v521
      %523 = vmatmul.mubr.f32.gmra.mrb[0].mxu0 %v522
      %v524 = vpop.f32.mrb[0].mxu0
      %v525 = vadd.f32 %v448, %v524
      %v526 = vpop.f32.mrb[0].mxu0
      %v527 = vadd.f32 %v450, %v526
      %528 = vdwg.mxu0
      %v529 = vand.u32 %v280, 4294901760
      %530 = vmatprep.subr.mxu0 %v529
      %v531 = vand.u32 %v279, 4294901760
      %532 = vmatpush1.msra.mxu0 %v531
      %533 = vmatprep.subr.mxu0 0.0
      %534 = vmatpush1.msra.mxu0 0.0
      %535 = vmatprep.subr.mxu0 0.0
      %536 = vmatpush1.msra.mxu0 0.0
      %537 = vmatprep.subr.mxu0 0.0
      %538 = vmatpush1.msra.mxu0 0.0
      %539 = vmatprep.subr.mxu0 0.0
      %540 = vmatpush1.msra.mxu0 0.0
      %541 = vmatprep.subr.mxu0 0.0
      %542 = vmatpush1.msra.mxu0 0.0
      %543 = vmatprep.subr.mxu0 0.0
      %544 = vmatpush1.msra.mxu0 0.0
      %545 = vmatprep.subr.mxu0 0.0
      %546 = vmatpush1.msra.mxu0 0.0
      %547 = vmatprep.subr.mxu0 0.0
      %548 = vmatpush1.msra.mxu0 0.0
      %549 = vmatprep.subr.mxu0 0.0
      %550 = vmatpush1.msra.mxu0 0.0
      %551 = vmatprep.subr.mxu0 0.0
      %552 = vmatpush1.msra.mxu0 0.0
      %553 = vmatprep.subr.mxu0 0.0
      %554 = vmatpush1.msra.mxu0 0.0
      %555 = vmatprep.subr.mxu0 0.0
      %556 = vmatpush1.msra.mxu0 0.0
      %557 = vmatprep.subr.mxu0 0.0
      %558 = vmatpush1.msra.mxu0 0.0
      %559 = vmatprep.subr.mxu0 0.0
      %560 = vmatpush1.msra.mxu0 0.0
      %561 = vmatprep.subr.mxu0 0.0
      %562 = vmatpush1.msra.mxu0 0.0
      %563 = vmatprep.subr.mxu0 0.0
      %564 = vmatpush1.msra.mxu0 0.0
      %565 = vmatprep.subr.mxu0 0.0
      %566 = vmatpush1.msra.mxu0 0.0
      %567 = vmatprep.subr.mxu0 0.0
      %568 = vmatpush1.msra.mxu0 0.0
      %569 = vmatprep.subr.mxu0 0.0
      %570 = vmatpush1.msra.mxu0 0.0
      %571 = vmatprep.subr.mxu0 0.0
      %572 = vmatpush1.msra.mxu0 0.0
      %573 = vmatprep.subr.mxu0 0.0
      %574 = vmatpush1.msra.mxu0 0.0
      %575 = vmatprep.subr.mxu0 0.0
      %576 = vmatpush1.msra.mxu0 0.0
      %577 = vmatprep.subr.mxu0 0.0
      %578 = vmatpush1.msra.mxu0 0.0
      %579 = vmatprep.subr.mxu0 0.0
      %580 = vmatpush1.msra.mxu0 0.0
      %581 = vmatprep.subr.mxu0 0.0
      %582 = vmatpush1.msra.mxu0 0.0
      %583 = vmatprep.subr.mxu0 0.0
      %584 = vmatpush1.msra.mxu0 0.0
      %585 = vmatprep.subr.mxu0 0.0
      %586 = vmatpush1.msra.mxu0 0.0
      %587 = vmatprep.subr.mxu0 0.0
      %588 = vmatpush1.msra.mxu0 0.0
      %589 = vmatprep.subr.mxu0 0.0
      %590 = vmatpush1.msra.mxu0 0.0
      %591 = vmatprep.subr.mxu0 0.0
      %592 = vmatpush1.msra.mxu0 0.0
      %593 = vmatprep.subr.mxu0 0.0
      %594 = vmatpush1.msra.mxu0 0.0
      %595 = vmatprep.mubr.f32.mxu0 0.0
      %v596 = vand.u32 %v290, 4294901760
      %v597 = vsub.f32 %v290, %v596
      %v598 = vand.u32 %v597, 4294901760
      %599 = vmatmul.mubr.f32.gmra.mrb[0].mxu0 %v598
      %v600 = vpop.f32.mrb[0].mxu0
      %v601 = vadd.f32 %v525, %v600
      %v602 = vpop.f32.mrb[0].mxu0
      %v603 = vadd.f32 %v527, %v602
      %604 = vdwg.mxu0
      %v605 = vand.u32 %v280, 4294901760
      %v606 = vsub.f32 %v280, %v605
      %v607 = vand.u32 %v606, 4294901760
      %608 = vmatprep.subr.mxu0 %v607
      %v609 = vand.u32 %v279, 4294901760
      %v610 = vsub.f32 %v279, %v609
      %v611 = vand.u32 %v610, 4294901760
      %612 = vmatpush1.msra.mxu0 %v611
      %613 = vmatprep.subr.mxu0 0.0
      %614 = vmatpush1.msra.mxu0 0.0
      %615 = vmatprep.subr.mxu0 0.0
      %616 = vmatpush1.msra.mxu0 0.0
      %617 = vmatprep.subr.mxu0 0.0
      %618 = vmatpush1.msra.mxu0 0.0
      %619 = vmatprep.subr.mxu0 0.0
      %620 = vmatpush1.msra.mxu0 0.0
      %621 = vmatprep.subr.mxu0 0.0
      %622 = vmatpush1.msra.mxu0 0.0
      %623 = vmatprep.subr.mxu0 0.0
      %624 = vmatpush1.msra.mxu0 0.0
      %625 = vmatprep.subr.mxu0 0.0
      %626 = vmatpush1.msra.mxu0 0.0
      %627 = vmatprep.subr.mxu0 0.0
      %628 = vmatpush1.msra.mxu0 0.0
      %629 = vmatprep.subr.mxu0 0.0
      %630 = vmatpush1.msra.mxu0 0.0
      %631 = vmatprep.subr.mxu0 0.0
      %632 = vmatpush1.msra.mxu0 0.0
      %633 = vmatprep.subr.mxu0 0.0
      %634 = vmatpush1.msra.mxu0 0.0
      %635 = vmatprep.subr.mxu0 0.0
      %636 = vmatpush1.msra.mxu0 0.0
      %637 = vmatprep.subr.mxu0 0.0
      %638 = vmatpush1.msra.mxu0 0.0
      %639 = vmatprep.subr.mxu0 0.0
      %640 = vmatpush1.msra.mxu0 0.0
      %641 = vmatprep.subr.mxu0 0.0
      %642 = vmatpush1.msra.mxu0 0.0
      %643 = vmatprep.subr.mxu0 0.0
      %644 = vmatpush1.msra.mxu0 0.0
      %645 = vmatprep.subr.mxu0 0.0
      %646 = vmatpush1.msra.mxu0 0.0
      %647 = vmatprep.subr.mxu0 0.0
      %648 = vmatpush1.msra.mxu0 0.0
      %649 = vmatprep.subr.mxu0 0.0
      %650 = vmatpush1.msra.mxu0 0.0
      %651 = vmatprep.subr.mxu0 0.0
      %652 = vmatpush1.msra.mxu0 0.0
      %653 = vmatprep.subr.mxu0 0.0
      %654 = vmatpush1.msra.mxu0 0.0
      %655 = vmatprep.subr.mxu0 0.0
      %656 = vmatpush1.msra.mxu0 0.0
      %657 = vmatprep.subr.mxu0 0.0
      %658 = vmatpush1.msra.mxu0 0.0
      %659 = vmatprep.subr.mxu0 0.0
      %660 = vmatpush1.msra.mxu0 0.0
      %661 = vmatprep.subr.mxu0 0.0
      %662 = vmatpush1.msra.mxu0 0.0
      %663 = vmatprep.subr.mxu0 0.0
      %664 = vmatpush1.msra.mxu0 0.0
      %665 = vmatprep.subr.mxu0 0.0
      %666 = vmatpush1.msra.mxu0 0.0
      %667 = vmatprep.subr.mxu0 0.0
      %668 = vmatpush1.msra.mxu0 0.0
      %669 = vmatprep.subr.mxu0 0.0
      %670 = vmatpush1.msra.mxu0 0.0
      %671 = vmatprep.subr.mxu0 0.0
      %672 = vmatpush1.msra.mxu0 0.0
      %673 = vmatprep.subr.mxu0 0.0
      %674 = vmatpush1.msra.mxu0 0.0
      %675 = vmatprep.mubr.f32.mxu0 0.0
      %v676 = vand.u32 %v290, 4294901760
      %677 = vmatmul.mubr.f32.gmra.mrb[0].mxu0 %v676
      %v678 = vpop.f32.mrb[0].mxu0
      %v679 = vadd.f32 %v601, %v678
      %v680 = vpop.f32.mrb[0].mxu0
      %v681 = vadd.f32 %v603, %v680
      %682 = vdwg.mxu0
      %v683 = vand.u32 %v280, 4294901760
      %684 = vmatprep.subr.mxu0 %v683
      %v685 = vand.u32 %v279, 4294901760
      %686 = vmatpush1.msra.mxu0 %v685
      %687 = vmatprep.subr.mxu0 0.0
      %688 = vmatpush1.msra.mxu0 0.0
      %689 = vmatprep.subr.mxu0 0.0
      %690 = vmatpush1.msra.mxu0 0.0
      %691 = vmatprep.subr.mxu0 0.0
      %692 = vmatpush1.msra.mxu0 0.0
      %693 = vmatprep.subr.mxu0 0.0
      %694 = vmatpush1.msra.mxu0 0.0
      %695 = vmatprep.subr.mxu0 0.0
      %696 = vmatpush1.msra.mxu0 0.0
      %697 = vmatprep.subr.mxu0 0.0
      %698 = vmatpush1.msra.mxu0 0.0
      %699 = vmatprep.subr.mxu0 0.0
      %700 = vmatpush1.msra.mxu0 0.0
      %701 = vmatprep.subr.mxu0 0.0
      %702 = vmatpush1.msra.mxu0 0.0
      %703 = vmatprep.subr.mxu0 0.0
      %704 = vmatpush1.msra.mxu0 0.0
      %705 = vmatprep.subr.mxu0 0.0
      %706 = vmatpush1.msra.mxu0 0.0
      %707 = vmatprep.subr.mxu0 0.0
      %708 = vmatpush1.msra.mxu0 0.0
      %709 = vmatprep.subr.mxu0 0.0
      %710 = vmatpush1.msra.mxu0 0.0
      %711 = vmatprep.subr.mxu0 0.0
      %712 = vmatpush1.msra.mxu0 0.0
      %713 = vmatprep.subr.mxu0 0.0
      %714 = vmatpush1.msra.mxu0 0.0
      %715 = vmatprep.subr.mxu0 0.0
      %716 = vmatpush1.msra.mxu0 0.0
      %717 = vmatprep.subr.mxu0 0.0
      %718 = vmatpush1.msra.mxu0 0.0
      %719 = vmatprep.subr.mxu0 0.0
      %720 = vmatpush1.msra.mxu0 0.0
      %721 = vmatprep.subr.mxu0 0.0
      %722 = vmatpush1.msra.mxu0 0.0
      %723 = vmatprep.subr.mxu0 0.0
      %724 = vmatpush1.msra.mxu0 0.0
      %725 = vmatprep.subr.mxu0 0.0
      %726 = vmatpush1.msra.mxu0 0.0
      %727 = vmatprep.subr.mxu0 0.0
      %728 = vmatpush1.msra.mxu0 0.0
      %729 = vmatprep.subr.mxu0 0.0
      %730 = vmatpush1.msra.mxu0 0.0
      %731 = vmatprep.subr.mxu0 0.0
      %732 = vmatpush1.msra.mxu0 0.0
      %733 = vmatprep.subr.mxu0 0.0
      %734 = vmatpush1.msra.mxu0 0.0
      %735 = vmatprep.subr.mxu0 0.0
      %736 = vmatpush1.msra.mxu0 0.0
      %737 = vmatprep.subr.mxu0 0.0
      %738 = vmatpush1.msra.mxu0 0.0
      %739 = vmatprep.subr.mxu0 0.0
      %740 = vmatpush1.msra.mxu0 0.0
      %741 = vmatprep.subr.mxu0 0.0
      %742 = vmatpush1.msra.mxu0 0.0
      %743 = vmatprep.subr.mxu0 0.0
      %744 = vmatpush1.msra.mxu0 0.0
      %745 = vmatprep.subr.mxu0 0.0
      %746 = vmatpush1.msra.mxu0 0.0
      %747 = vmatprep.subr.mxu0 0.0
      %748 = vmatpush1.msra.mxu0 0.0
      %749 = vmatprep.mubr.f32.mxu0 0.0
      %v750 = vand.u32 %v290, 4294901760
      %751 = vmatmul.mubr.f32.gmra.mrb[0].mxu0 %v750
      %v752 = vpop.f32.mrb[0].mxu0
      %v753 = vadd.f32 %v679, %v752
      %v754 = vpop.f32.mrb[0].mxu0
      %v755 = vadd.f32 %v681, %v754
      %756 = vdwg.mxu0
      %v757 = vmax.f32 %v753, 0.0
      %v758 = vmax.f32 %v755, 0.0
      %759 = vrot.lane.b32.xlu0 %v757, 17
      %v760 = vpop.permute.xlu0 %759
      %761 = vrot.lane.b32.xlu0 %v758, 17
      %v762 = vpop.permute.xlu0 %761
      %v763 = vlaneseq
      %v764 = vand.u32 %v763, 127
      %vm765 = vcmp.lt.s32.totalorder %v764, 17
      %v766 = vsel %vm765, %v760, %v762
      %v767 = vsel %vm765, %v762, %v760
      %v768 = vld [vmem:[%s5] sm:$0x3]
      %v770 = vlaneseq
      %v771 = vshrl.u32 %v770, 7
      %v772 = vsub.s32 0, %v771
      %v773 = vrot.slane %v768, %v772
      %v774 = vlaneseq
      %v775 = vshrl.u32 %v774, 7
      %v776 = vsub.s32 1, %v775
      %v777 = vrot.slane %v768, %v776
      %v780 = vmul.f32 %v767, %v773
      %v781 = vmul.f32 %v766, %v777
      %782 = vst [vmem:[#allocation2] sm:$0xff] %v780
      %783 = vst [vmem:[#allocation2 + $0x8] sm:$0xff] %v781
      %784 = vrot.lane.b32.xlu0 %v279, 17
      %v785 = vpop.permute.xlu0 %784
      %786 = vrot.lane.b32.xlu0 %v280, 17
      %v787 = vpop.permute.xlu0 %786
      %v788 = vsel %vm765, %v785, %v787
      %v789 = vsel %vm765, %v787, %v785
      %v790 = vld [vmem:[%s6] sm:$0x3]
      %v792 = vlaneseq
      %v793 = vshrl.u32 %v792, 7
      %v794 = vsub.s32 0, %v793
      %v795 = vrot.slane %v790, %v794
      %v796 = vlaneseq
      %v797 = vshrl.u32 %v796, 7
      %v798 = vsub.s32 1, %v797
      %v799 = vrot.slane %v790, %v798
      %v802 = vadd.f32 %v789, %v795
      %v803 = vadd.f32 %v788, %v799
      %v804 = vmax.f32 %v279, %v802
      %v805 = vmax.f32 %v280, %v803
      %806 = vrot.lane.b32.xlu0 %v757, 16
      %v807 = vpop.permute.xlu0 %806
      %808 = vrot.lane.b32.xlu0 %v758, 16
      %v809 = vpop.permute.xlu0 %808
      %vm810 = vcmp.lt.s32.totalorder %v764, 16
      %v811 = vsel %vm810, %v807, %v809
      %v812 = vsel %vm810, %v809, %v807
      %s813 = scalar_lea.vmem %s5, 2
      %v814 = vld [vmem:[%s813] sm:$0x3]
      %v816 = vlaneseq
      %v817 = vshrl.u32 %v816, 7
      %v818 = vsub.s32 0, %v817
      %v819 = vrot.slane %v814, %v818
      %v820 = vlaneseq
      %v821 = vshrl.u32 %v820, 7
      %v822 = vsub.s32 1, %v821
      %v823 = vrot.slane %v814, %v822
      %v826 = vmul.f32 %v812, %v819
      %v827 = vmul.f32 %v811, %v823
      %828 = vst [vmem:[#allocation2 + $0x10] sm:$0xff] %v826
      %829 = vst [vmem:[#allocation2 + $0x18] sm:$0xff] %v827
      %830 = vrot.lane.b32.xlu0 %v279, 16
      %v831 = vpop.permute.xlu0 %830
      %832 = vrot.lane.b32.xlu0 %v280, 16
      %v833 = vpop.permute.xlu0 %832
      %v834 = vsel %vm810, %v831, %v833
      %v835 = vsel %vm810, %v833, %v831
      %s836 = scalar_lea.vmem %s6, 2
      %v837 = vld [vmem:[%s836] sm:$0x3]
      %v839 = vlaneseq
      %v840 = vshrl.u32 %v839, 7
      %v841 = vsub.s32 0, %v840
      %v842 = vrot.slane %v837, %v841
      %v843 = vlaneseq
      %v844 = vshrl.u32 %v843, 7
      %v845 = vsub.s32 1, %v844
      %v846 = vrot.slane %v837, %v845
      %v849 = vadd.f32 %v835, %v842
      %v850 = vadd.f32 %v834, %v846
      %v851 = vmax.f32 %v804, %v849
      %v852 = vmax.f32 %v805, %v850
      %853 = vrot.lane.b32.xlu0 %v757, 15
      %v854 = vpop.permute.xlu0 %853
      %855 = vrot.lane.b32.xlu0 %v758, 15
      %v856 = vpop.permute.xlu0 %855
      %vm857 = vcmp.lt.s32.totalorder %v764, 15
      %v858 = vsel %vm857, %v854, %v856
      %v859 = vsel %vm857, %v856, %v854
      %s860 = scalar_lea.vmem %s5, 4
      %v861 = vld [vmem:[%s860] sm:$0x3]
      %v863 = vlaneseq
      %v864 = vshrl.u32 %v863, 7
      %v865 = vsub.s32 0, %v864
      %v866 = vrot.slane %v861, %v865
      %v867 = vlaneseq
      %v868 = vshrl.u32 %v867, 7
      %v869 = vsub.s32 1, %v868
      %v870 = vrot.slane %v861, %v869
      %v873 = vmul.f32 %v859, %v866
      %v874 = vmul.f32 %v858, %v870
      %875 = vst [vmem:[#allocation2 + $0x20] sm:$0xff] %v873
      %876 = vst [vmem:[#allocation2 + $0x28] sm:$0xff] %v874
      %877 = vrot.lane.b32.xlu0 %v279, 15
      %v878 = vpop.permute.xlu0 %877
      %879 = vrot.lane.b32.xlu0 %v280, 15
      %v880 = vpop.permute.xlu0 %879
      %v881 = vsel %vm857, %v878, %v880
      %v882 = vsel %vm857, %v880, %v878
      %s883 = scalar_lea.vmem %s6, 4
      %v884 = vld [vmem:[%s883] sm:$0x3]
      %v886 = vlaneseq
      %v887 = vshrl.u32 %v886, 7
      %v888 = vsub.s32 0, %v887
      %v889 = vrot.slane %v884, %v888
      %v890 = vlaneseq
      %v891 = vshrl.u32 %v890, 7
      %v892 = vsub.s32 1, %v891
      %v893 = vrot.slane %v884, %v892
      %v896 = vadd.f32 %v882, %v889
      %v897 = vadd.f32 %v881, %v893
      %v898 = vmax.f32 %v851, %v896
      %v899 = vmax.f32 %v852, %v897
      %900 = vrot.lane.b32.xlu0 %v757, 1
      %v901 = vpop.permute.xlu0 %900
      %902 = vrot.lane.b32.xlu0 %v758, 1
      %v903 = vpop.permute.xlu0 %902
      %vm904 = vcmp.lt.s32.totalorder %v764, 1
      %v905 = vsel %vm904, %v901, %v903
      %v906 = vsel %vm904, %v903, %v901
      %s907 = scalar_lea.vmem %s5, 6
      %v908 = vld [vmem:[%s907] sm:$0x3]
      %v910 = vlaneseq
      %v911 = vshrl.u32 %v910, 7
      %v912 = vsub.s32 0, %v911
      %v913 = vrot.slane %v908, %v912
      %v914 = vlaneseq
      %v915 = vshrl.u32 %v914, 7
      %v916 = vsub.s32 1, %v915
      %v917 = vrot.slane %v908, %v916
      %v920 = vmul.f32 %v906, %v913
      %v921 = vmul.f32 %v905, %v917
      %922 = vst [vmem:[#allocation2 + $0x30] sm:$0xff] %v920
      %923 = vst [vmem:[#allocation2 + $0x38] sm:$0xff] %v921
      %924 = vrot.lane.b32.xlu0 %v279, 1
      %v925 = vpop.permute.xlu0 %924
      %926 = vrot.lane.b32.xlu0 %v280, 1
      %v927 = vpop.permute.xlu0 %926
      %v928 = vsel %vm904, %v925, %v927
      %v929 = vsel %vm904, %v927, %v925
      %s930 = scalar_lea.vmem %s6, 6
      %v931 = vld [vmem:[%s930] sm:$0x3]
      %v933 = vlaneseq
      %v934 = vshrl.u32 %v933, 7
      %v935 = vsub.s32 0, %v934
      %v936 = vrot.slane %v931, %v935
      %v937 = vlaneseq
      %v938 = vshrl.u32 %v937, 7
      %v939 = vsub.s32 1, %v938
      %v940 = vrot.slane %v931, %v939
      %v943 = vadd.f32 %v929, %v936
      %v944 = vadd.f32 %v928, %v940
      %v945 = vmax.f32 %v898, %v943
      %v946 = vmax.f32 %v899, %v944
      %947 = vst [vmem:[#allocation2 + $0x40] sm:$0xff] %v757
      %948 = vst [vmem:[#allocation2 + $0x48] sm:$0xff] %v758
      %949 = vrot.lane.b32.xlu0 %v757, 127
      %v950 = vpop.permute.xlu0 %949
      %951 = vrot.lane.b32.xlu0 %v758, 127
      %v952 = vpop.permute.xlu0 %951
      %vm953 = vcmp.lt.s32.totalorder %v764, 127
      %v954 = vsel %vm953, %v950, %v952
      %v955 = vsel %vm953, %v952, %v950
      %s956 = scalar_lea.vmem %s5, 10
      %v957 = vld [vmem:[%s956] sm:$0x3]
      %v959 = vlaneseq
      %v960 = vshrl.u32 %v959, 7
      %v961 = vsub.s32 0, %v960
      %v962 = vrot.slane %v957, %v961
      %v963 = vlaneseq
      %v964 = vshrl.u32 %v963, 7
      %v965 = vsub.s32 1, %v964
      %v966 = vrot.slane %v957, %v965
      %v969 = vmul.f32 %v954, %v962
      %v970 = vmul.f32 %v955, %v966
      %971 = vst [vmem:[#allocation2 + $0x50] sm:$0xff] %v969
      %972 = vst [vmem:[#allocation2 + $0x58] sm:$0xff] %v970
      %973 = vrot.lane.b32.xlu0 %v279, 127
      %v974 = vpop.permute.xlu0 %973
      %975 = vrot.lane.b32.xlu0 %v280, 127
      %v976 = vpop.permute.xlu0 %975
      %v977 = vsel %vm953, %v974, %v976
      %v978 = vsel %vm953, %v976, %v974
      %s979 = scalar_lea.vmem %s6, 10
      %v980 = vld [vmem:[%s979] sm:$0x3]
      %v982 = vlaneseq
      %v983 = vshrl.u32 %v982, 7
      %v984 = vsub.s32 0, %v983
      %v985 = vrot.slane %v980, %v984
      %v986 = vlaneseq
      %v987 = vshrl.u32 %v986, 7
      %v988 = vsub.s32 1, %v987
      %v989 = vrot.slane %v980, %v988
      %v992 = vadd.f32 %v977, %v985
      %v993 = vadd.f32 %v978, %v989
      %v994 = vmax.f32 %v945, %v992
      %v995 = vmax.f32 %v946, %v993
      %996 = vrot.lane.b32.xlu0 %v757, 113
      %v997 = vpop.permute.xlu0 %996
      %998 = vrot.lane.b32.xlu0 %v758, 113
      %v999 = vpop.permute.xlu0 %998
      %vm1000 = vcmp.lt.s32.totalorder %v764, 113
      %v1001 = vsel %vm1000, %v997, %v999
      %v1002 = vsel %vm1000, %v999, %v997
      %s1003 = scalar_lea.vmem %s5, 12
      %v1004 = vld [vmem:[%s1003] sm:$0x3]
      %v1006 = vlaneseq
      %v1007 = vshrl.u32 %v1006, 7
      %v1008 = vsub.s32 0, %v1007
      %v1009 = vrot.slane %v1004, %v1008
      %v1010 = vlaneseq
      %v1011 = vshrl.u32 %v1010, 7
      %v1012 = vsub.s32 1, %v1011
      %v1013 = vrot.slane %v1004, %v1012
      %v1016 = vmul.f32 %v1001, %v1009
      %v1017 = vmul.f32 %v1002, %v1013
      %1018 = vst [vmem:[#allocation2 + $0x60] sm:$0xff] %v1016
      %1019 = vst [vmem:[#allocation2 + $0x68] sm:$0xff] %v1017
      %1020 = vrot.lane.b32.xlu0 %v279, 113
      %v1021 = vpop.permute.xlu0 %1020
      %1022 = vrot.lane.b32.xlu0 %v280, 113
      %v1023 = vpop.permute.xlu0 %1022
      %v1024 = vsel %vm1000, %v1021, %v1023
      %v1025 = vsel %vm1000, %v1023, %v1021
      %s1026 = scalar_lea.vmem %s6, 12
      %v1027 = vld [vmem:[%s1026] sm:$0x3]
      %v1029 = vlaneseq
      %v1030 = vshrl.u32 %v1029, 7
      %v1031 = vsub.s32 0, %v1030
      %v1032 = vrot.slane %v1027, %v1031
      %v1033 = vlaneseq
      %v1034 = vshrl.u32 %v1033, 7
      %v1035 = vsub.s32 1, %v1034
      %v1036 = vrot.slane %v1027, %v1035
      %v1039 = vadd.f32 %v1024, %v1032
      %v1040 = vadd.f32 %v1025, %v1036
      %v1041 = vmax.f32 %v994, %v1039
      %v1042 = vmax.f32 %v995, %v1040
      %1043 = vrot.lane.b32.xlu0 %v757, 112
      %v1044 = vpop.permute.xlu0 %1043
      %1045 = vrot.lane.b32.xlu0 %v758, 112
      %v1046 = vpop.permute.xlu0 %1045
      %vm1047 = vcmp.lt.s32.totalorder %v764, 112
      %v1048 = vsel %vm1047, %v1044, %v1046
      %v1049 = vsel %vm1047, %v1046, %v1044
      %s1050 = scalar_lea.vmem %s5, 14
      %v1051 = vld [vmem:[%s1050] sm:$0x3]
      %v1053 = vlaneseq
      %v1054 = vshrl.u32 %v1053, 7
      %v1055 = vsub.s32 0, %v1054
      %v1056 = vrot.slane %v1051, %v1055
      %v1057 = vlaneseq
      %v1058 = vshrl.u32 %v1057, 7
      %v1059 = vsub.s32 1, %v1058
      %v1060 = vrot.slane %v1051, %v1059
      %v1063 = vmul.f32 %v1048, %v1056
      %v1064 = vmul.f32 %v1049, %v1060
      %1065 = vst [vmem:[#allocation2 + $0x70] sm:$0xff] %v1063
      %1066 = vst [vmem:[#allocation2 + $0x78] sm:$0xff] %v1064
      %1067 = vrot.lane.b32.xlu0 %v279, 112
      %v1068 = vpop.permute.xlu0 %1067
      %1069 = vrot.lane.b32.xlu0 %v280, 112
      %v1070 = vpop.permute.xlu0 %1069
      %v1071 = vsel %vm1047, %v1068, %v1070
      %v1072 = vsel %vm1047, %v1070, %v1068
      %s1073 = scalar_lea.vmem %s6, 14
      %v1074 = vld [vmem:[%s1073] sm:$0x3]
      %v1076 = vlaneseq
      %v1077 = vshrl.u32 %v1076, 7
      %v1078 = vsub.s32 0, %v1077
      %v1079 = vrot.slane %v1074, %v1078
      %v1080 = vlaneseq
      %v1081 = vshrl.u32 %v1080, 7
      %v1082 = vsub.s32 1, %v1081
      %v1083 = vrot.slane %v1074, %v1082
      %v1086 = vadd.f32 %v1071, %v1079
      %v1087 = vadd.f32 %v1072, %v1083
      %v1088 = vmax.f32 %v1041, %v1086
      %v1089 = vmax.f32 %v1042, %v1087
      %1090 = vrot.lane.b32.xlu0 %v757, 111
      %v1091 = vpop.permute.xlu0 %1090
      %1092 = vrot.lane.b32.xlu0 %v758, 111
      %v1093 = vpop.permute.xlu0 %1092
      %vm1094 = vcmp.lt.s32.totalorder %v764, 111
      %v1095 = vsel %vm1094, %v1091, %v1093
      %v1096 = vsel %vm1094, %v1093, %v1091
      %s1097 = scalar_lea.vmem %s5, 16
      %v1098 = vld [vmem:[%s1097] sm:$0x3]
      %v1100 = vlaneseq
      %v1101 = vshrl.u32 %v1100, 7
      %v1102 = vsub.s32 0, %v1101
      %v1103 = vrot.slane %v1098, %v1102
      %v1104 = vlaneseq
      %v1105 = vshrl.u32 %v1104, 7
      %v1106 = vsub.s32 1, %v1105
      %v1107 = vrot.slane %v1098, %v1106
      %v1110 = vmul.f32 %v1095, %v1103
      %v1111 = vmul.f32 %v1096, %v1107
      %1112 = vst [vmem:[#allocation2 + $0x80] sm:$0xff] %v1110
      %1113 = vst [vmem:[#allocation2 + $0x88] sm:$0xff] %v1111
      %1114 = vrot.lane.b32.xlu0 %v279, 111
      %v1115 = vpop.permute.xlu0 %1114
      %1116 = vrot.lane.b32.xlu0 %v280, 111
      %v1117 = vpop.permute.xlu0 %1116
      %v1118 = vsel %vm1094, %v1115, %v1117
      %v1119 = vsel %vm1094, %v1117, %v1115
      %s1120 = scalar_lea.vmem %s6, 16
      %v1121 = vld [vmem:[%s1120] sm:$0x3]
      %v1123 = vlaneseq
      %v1124 = vshrl.u32 %v1123, 7
      %v1125 = vsub.s32 0, %v1124
      %v1126 = vrot.slane %v1121, %v1125
      %v1127 = vlaneseq
      %v1128 = vshrl.u32 %v1127, 7
      %v1129 = vsub.s32 1, %v1128
      %v1130 = vrot.slane %v1121, %v1129
      %v1133 = vadd.f32 %v1118, %v1126
      %v1134 = vadd.f32 %v1119, %v1130
      %v1135 = vmax.f32 %v1088, %v1133
      %v1136 = vmax.f32 %v1089, %v1134
      %1137 = vst [vmem:[#allocation2 + $0x90] sm:$0xff] %v1135
      %1138 = vst [vmem:[#allocation2 + $0x98] sm:$0xff] %v1136
      %1139 = vst [vmem:[#allocation2 + $0xa0] sm:$0xff] %v279
      %1140 = vst [vmem:[#allocation2 + $0xa8] sm:$0xff] %v280
      %v1141 = vld [vmem:[%s3] sm:$0xff]
      %v1142 = vld [vmem:[%s3 + $0x8] sm:$0xff]
      %v1143 = vld [vmem:[%s3 + $0x10] sm:$0xf]
      %v1144 = vld [vmem:[#allocation2] sm:$0xff]
      %v1145 = vld [vmem:[#allocation2 + $0x8] sm:$0xff]
      %v1146 = vld [vmem:[#allocation2 + $0x10] sm:$0xff]
      %v1147 = vld [vmem:[#allocation2 + $0x18] sm:$0xff]
      %v1148 = vld [vmem:[#allocation2 + $0x20] sm:$0xff]
      %v1149 = vld [vmem:[#allocation2 + $0x28] sm:$0xff]
      %v1150 = vld [vmem:[#allocation2 + $0x30] sm:$0xff]
      %v1151 = vld [vmem:[#allocation2 + $0x38] sm:$0xff]
      %v1152 = vld [vmem:[#allocation2 + $0x40] sm:$0xff]
      %v1153 = vld [vmem:[#allocation2 + $0x48] sm:$0xff]
      %v1154 = vld [vmem:[#allocation2 + $0x50] sm:$0xff]
      %v1155 = vld [vmem:[#allocation2 + $0x58] sm:$0xff]
      %v1156 = vld [vmem:[#allocation2 + $0x60] sm:$0xff]
      %v1157 = vld [vmem:[#allocation2 + $0x68] sm:$0xff]
      %v1158 = vld [vmem:[#allocation2 + $0x70] sm:$0xff]
      %v1159 = vld [vmem:[#allocation2 + $0x78] sm:$0xff]
      %v1160 = vld [vmem:[#allocation2 + $0x80] sm:$0xff]
      %v1161 = vld [vmem:[#allocation2 + $0x88] sm:$0xff]
      %v1162 = vld [vmem:[#allocation2 + $0x90] sm:$0xff]
      %v1163 = vld [vmem:[#allocation2 + $0x98] sm:$0xff]
      %v1164 = vld [vmem:[#allocation2 + $0xa0] sm:$0xff]
      %v1165 = vld [vmem:[#allocation2 + $0xa8] sm:$0xff]
      %v1166 = vld [vmem:[%s4] sm:$0xff]
      %v1167 = vld [vmem:[%s4 + $0x8] sm:$0xff]
      %v1168 = vld [vmem:[%s4 + $0x10] sm:$0xf]
      %1170 = vset.pattern.permute.xlu0 0
      %1171 = vperm.xlu0 %1170, %v1166
      %v1172 = vpop.permute.xlu0 %1171
      %1175 = vset.pattern.permute.xlu0 0
      %1176 = vperm.xlu0 %1175, %v1167
      %v1177 = vpop.permute.xlu0 %1176
      %1180 = vset.pattern.permute.xlu0 0
      %1181 = vperm.xlu0 %1180, %v1168
      %v1182 = vpop.permute.xlu0 %1181
      %vm1184 = vcmask 719872
      %v1186 = vsel %vm1184, %v1141, 0
      %v1189 = vsel %vm1184, %v1142, 0
      %v1192 = vsel %vm1184, %v1143, 0
      %v1194 = vand.u32 %v1145, 4294901760
      %1195 = vmatprep.subr.mxu0 %v1194
      %v1196 = vand.u32 %v1144, 4294901760
      %1197 = vmatpush1.msra.mxu0 %v1196
      %v1198 = vand.u32 %v1147, 4294901760
      %1199 = vmatprep.subr.mxu0 %v1198
      %v1200 = vand.u32 %v1146, 4294901760
      %1201 = vmatpush1.msra.mxu0 %v1200
      %v1202 = vand.u32 %v1149, 4294901760
      %1203 = vmatprep.subr.mxu0 %v1202
      %v1204 = vand.u32 %v1148, 4294901760
      %1205 = vmatpush1.msra.mxu0 %v1204
      %v1206 = vand.u32 %v1151, 4294901760
      %1207 = vmatprep.subr.mxu0 %v1206
      %v1208 = vand.u32 %v1150, 4294901760
      %1209 = vmatpush1.msra.mxu0 %v1208
      %v1210 = vand.u32 %v1153, 4294901760
      %1211 = vmatprep.subr.mxu0 %v1210
      %v1212 = vand.u32 %v1152, 4294901760
      %1213 = vmatpush1.msra.mxu0 %v1212
      %v1214 = vand.u32 %v1155, 4294901760
      %1215 = vmatprep.subr.mxu0 %v1214
      %v1216 = vand.u32 %v1154, 4294901760
      %1217 = vmatpush1.msra.mxu0 %v1216
      %v1218 = vand.u32 %v1157, 4294901760
      %1219 = vmatprep.subr.mxu0 %v1218
      %v1220 = vand.u32 %v1156, 4294901760
      %1221 = vmatpush1.msra.mxu0 %v1220
      %v1222 = vand.u32 %v1159, 4294901760
      %1223 = vmatprep.subr.mxu0 %v1222
      %v1224 = vand.u32 %v1158, 4294901760
      %1225 = vmatpush1.msra.mxu0 %v1224
      %v1226 = vand.u32 %v1161, 4294901760
      %1227 = vmatprep.subr.mxu0 %v1226
      %v1228 = vand.u32 %v1160, 4294901760
      %1229 = vmatpush1.msra.mxu0 %v1228
      %v1230 = vand.u32 %v1163, 4294901760
      %1231 = vmatprep.subr.mxu0 %v1230
      %v1232 = vand.u32 %v1162, 4294901760
      %1233 = vmatpush1.msra.mxu0 %v1232
      %v1234 = vand.u32 %v1165, 4294901760
      %1235 = vmatprep.subr.mxu0 %v1234
      %v1236 = vand.u32 %v1164, 4294901760
      %1237 = vmatpush1.msra.mxu0 %v1236
      %1238 = vmatprep.subr.mxu0 0.0
      %1239 = vmatpush1.msra.mxu0 0.0
      %1240 = vmatprep.subr.mxu0 0.0
      %1241 = vmatpush1.msra.mxu0 0.0
      %1242 = vmatprep.subr.mxu0 0.0
      %1243 = vmatpush1.msra.mxu0 0.0
      %1244 = vmatprep.subr.mxu0 0.0
      %1245 = vmatpush1.msra.mxu0 0.0
      %1246 = vmatprep.subr.mxu0 0.0
      %1247 = vmatpush1.msra.mxu0 0.0
      %1248 = vmatprep.subr.mxu0 0.0
      %1249 = vmatpush1.msra.mxu0 0.0
      %1250 = vmatprep.subr.mxu0 0.0
      %1251 = vmatpush1.msra.mxu0 0.0
      %1252 = vmatprep.subr.mxu0 0.0
      %1253 = vmatpush1.msra.mxu0 0.0
      %1254 = vmatprep.subr.mxu0 0.0
      %1255 = vmatpush1.msra.mxu0 0.0
      %1256 = vmatprep.subr.mxu0 0.0
      %1257 = vmatpush1.msra.mxu0 0.0
      %1258 = vmatprep.subr.mxu0 0.0
      %1259 = vmatpush1.msra.mxu0 0.0
      %1260 = vmatprep.subr.mxu0 0.0
      %1261 = vmatpush1.msra.mxu0 0.0
      %1262 = vmatprep.subr.mxu0 0.0
      %1263 = vmatpush1.msra.mxu0 0.0
      %1264 = vmatprep.subr.mxu0 0.0
      %1265 = vmatpush1.msra.mxu0 0.0
      %1266 = vmatprep.subr.mxu0 0.0
      %1267 = vmatpush1.msra.mxu0 0.0
      %1268 = vmatprep.subr.mxu0 0.0
      %1269 = vmatpush1.msra.mxu0 0.0
      %1270 = vmatprep.subr.mxu0 0.0
      %1271 = vmatpush1.msra.mxu0 0.0
      %1272 = vmatprep.subr.mxu0 0.0
      %1273 = vmatpush1.msra.mxu0 0.0
      %1274 = vmatprep.subr.mxu0 0.0
      %1275 = vmatpush1.msra.mxu0 0.0
      %1276 = vmatprep.subr.mxu0 0.0
      %1277 = vmatpush1.msra.mxu0 0.0
      %1278 = vmatprep.subr.mxu0 0.0
      %1279 = vmatpush1.msra.mxu0 0.0
      %1280 = vmatprep.mubr.f32.mxu0 0.0
      %v1281 = vand.u32 %v1186, 4294901760
      %v1282 = vsub.f32 %v1186, %v1281
      %v1283 = vand.u32 %v1282, 4294901760
      %v1284 = vsub.f32 %v1282, %v1283
      %v1285 = vand.u32 %v1284, 4294901760
      %1286 = vmatmul.mubr.f32.gmra.mrb[0].mxu0 %v1285
      %v1287 = vpop.f32.mrb[0].mxu0
      %v1288 = vadd.f32 %v1172, %v1287
      %v1289 = vpop.f32.mrb[0].mxu0
      %v1290 = vadd.f32 %v1172, %v1289
      %1291 = vmatprep.mubr.f32.mxu0 0.0
      %v1292 = vand.u32 %v1189, 4294901760
      %v1293 = vsub.f32 %v1189, %v1292
      %v1294 = vand.u32 %v1293, 4294901760
      %v1295 = vsub.f32 %v1293, %v1294
      %v1296 = vand.u32 %v1295, 4294901760
      %1297 = vmatmul.mubr.f32.gmra.mrb[0].mxu0 %v1296
      %v1298 = vpop.f32.mrb[0].mxu0
      %v1299 = vadd.f32 %v1177, %v1298
      %v1300 = vpop.f32.mrb[0].mxu0
      %v1301 = vadd.f32 %v1177, %v1300
      %1302 = vmatprep.mubr.f32.mxu0 0.0
      %v1303 = vand.u32 %v1192, 4294901760
      %v1304 = vsub.f32 %v1192, %v1303
      %v1305 = vand.u32 %v1304, 4294901760
      %v1306 = vsub.f32 %v1304, %v1305
      %v1307 = vand.u32 %v1306, 4294901760
      %1308 = vmatmul.mubr.f32.gmra.mrb[0].mxu0 %v1307
      %v1309 = vpop.f32.mrb[0].mxu0
      %v1310 = vadd.f32 %v1182, %v1309
      %v1311 = vpop.f32.mrb[0].mxu0
      %v1312 = vadd.f32 %v1182, %v1311
      %1313 = vdwg.mxu0
      %v1314 = vand.u32 %v1145, 4294901760
      %v1315 = vsub.f32 %v1145, %v1314
      %v1316 = vand.u32 %v1315, 4294901760
      %v1317 = vsub.f32 %v1315, %v1316
      %v1318 = vand.u32 %v1317, 4294901760
      %1319 = vmatprep.subr.mxu0 %v1318
      %v1320 = vand.u32 %v1144, 4294901760
      %v1321 = vsub.f32 %v1144, %v1320
      %v1322 = vand.u32 %v1321, 4294901760
      %v1323 = vsub.f32 %v1321, %v1322
      %v1324 = vand.u32 %v1323, 4294901760
      %1325 = vmatpush1.msra.mxu0 %v1324
      %v1326 = vand.u32 %v1147, 4294901760
      %v1327 = vsub.f32 %v1147, %v1326
      %v1328 = vand.u32 %v1327, 4294901760
      %v1329 = vsub.f32 %v1327, %v1328
      %v1330 = vand.u32 %v1329, 4294901760
      %1331 = vmatprep.subr.mxu0 %v1330
      %v1332 = vand.u32 %v1146, 4294901760
      %v1333 = vsub.f32 %v1146, %v1332
      %v1334 = vand.u32 %v1333, 4294901760
      %v1335 = vsub.f32 %v1333, %v1334
      %v1336 = vand.u32 %v1335, 4294901760
      %1337 = vmatpush1.msra.mxu0 %v1336
      %v1338 = vand.u32 %v1149, 4294901760
      %v1339 = vsub.f32 %v1149, %v1338
      %v1340 = vand.u32 %v1339, 4294901760
      %v1341 = vsub.f32 %v1339, %v1340
      %v1342 = vand.u32 %v1341, 4294901760
      %1343 = vmatprep.subr.mxu0 %v1342
      %v1344 = vand.u32 %v1148, 4294901760
      %v1345 = vsub.f32 %v1148, %v1344
      %v1346 = vand.u32 %v1345, 4294901760
      %v1347 = vsub.f32 %v1345, %v1346
      %v1348 = vand.u32 %v1347, 4294901760
      %1349 = vmatpush1.msra.mxu0 %v1348
      %v1350 = vand.u32 %v1151, 4294901760
      %v1351 = vsub.f32 %v1151, %v1350
      %v1352 = vand.u32 %v1351, 4294901760
      %v1353 = vsub.f32 %v1351, %v1352
      %v1354 = vand.u32 %v1353, 4294901760
      %1355 = vmatprep.subr.mxu0 %v1354
      %v1356 = vand.u32 %v1150, 4294901760
      %v1357 = vsub.f32 %v1150, %v1356
      %v1358 = vand.u32 %v1357, 4294901760
      %v1359 = vsub.f32 %v1357, %v1358
      %v1360 = vand.u32 %v1359, 4294901760
      %1361 = vmatpush1.msra.mxu0 %v1360
      %v1362 = vand.u32 %v1153, 4294901760
      %v1363 = vsub.f32 %v1153, %v1362
      %v1364 = vand.u32 %v1363, 4294901760
      %v1365 = vsub.f32 %v1363, %v1364
      %v1366 = vand.u32 %v1365, 4294901760
      %1367 = vmatprep.subr.mxu0 %v1366
      %v1368 = vand.u32 %v1152, 4294901760
      %v1369 = vsub.f32 %v1152, %v1368
      %v1370 = vand.u32 %v1369, 4294901760
      %v1371 = vsub.f32 %v1369, %v1370
      %v1372 = vand.u32 %v1371, 4294901760
      %1373 = vmatpush1.msra.mxu0 %v1372
      %v1374 = vand.u32 %v1155, 4294901760
      %v1375 = vsub.f32 %v1155, %v1374
      %v1376 = vand.u32 %v1375, 4294901760
      %v1377 = vsub.f32 %v1375, %v1376
      %v1378 = vand.u32 %v1377, 4294901760
      %1379 = vmatprep.subr.mxu0 %v1378
      %v1380 = vand.u32 %v1154, 4294901760
      %v1381 = vsub.f32 %v1154, %v1380
      %v1382 = vand.u32 %v1381, 4294901760
      %v1383 = vsub.f32 %v1381, %v1382
      %v1384 = vand.u32 %v1383, 4294901760
      %1385 = vmatpush1.msra.mxu0 %v1384
      %v1386 = vand.u32 %v1157, 4294901760
      %v1387 = vsub.f32 %v1157, %v1386
      %v1388 = vand.u32 %v1387, 4294901760
      %v1389 = vsub.f32 %v1387, %v1388
      %v1390 = vand.u32 %v1389, 4294901760
      %1391 = vmatprep.subr.mxu0 %v1390
      %v1392 = vand.u32 %v1156, 4294901760
      %v1393 = vsub.f32 %v1156, %v1392
      %v1394 = vand.u32 %v1393, 4294901760
      %v1395 = vsub.f32 %v1393, %v1394
      %v1396 = vand.u32 %v1395, 4294901760
      %1397 = vmatpush1.msra.mxu0 %v1396
      %v1398 = vand.u32 %v1159, 4294901760
      %v1399 = vsub.f32 %v1159, %v1398
      %v1400 = vand.u32 %v1399, 4294901760
      %v1401 = vsub.f32 %v1399, %v1400
      %v1402 = vand.u32 %v1401, 4294901760
      %1403 = vmatprep.subr.mxu0 %v1402
      %v1404 = vand.u32 %v1158, 4294901760
      %v1405 = vsub.f32 %v1158, %v1404
      %v1406 = vand.u32 %v1405, 4294901760
      %v1407 = vsub.f32 %v1405, %v1406
      %v1408 = vand.u32 %v1407, 4294901760
      %1409 = vmatpush1.msra.mxu0 %v1408
      %v1410 = vand.u32 %v1161, 4294901760
      %v1411 = vsub.f32 %v1161, %v1410
      %v1412 = vand.u32 %v1411, 4294901760
      %v1413 = vsub.f32 %v1411, %v1412
      %v1414 = vand.u32 %v1413, 4294901760
      %1415 = vmatprep.subr.mxu0 %v1414
      %v1416 = vand.u32 %v1160, 4294901760
      %v1417 = vsub.f32 %v1160, %v1416
      %v1418 = vand.u32 %v1417, 4294901760
      %v1419 = vsub.f32 %v1417, %v1418
      %v1420 = vand.u32 %v1419, 4294901760
      %1421 = vmatpush1.msra.mxu0 %v1420
      %v1422 = vand.u32 %v1163, 4294901760
      %v1423 = vsub.f32 %v1163, %v1422
      %v1424 = vand.u32 %v1423, 4294901760
      %v1425 = vsub.f32 %v1423, %v1424
      %v1426 = vand.u32 %v1425, 4294901760
      %1427 = vmatprep.subr.mxu0 %v1426
      %v1428 = vand.u32 %v1162, 4294901760
      %v1429 = vsub.f32 %v1162, %v1428
      %v1430 = vand.u32 %v1429, 4294901760
      %v1431 = vsub.f32 %v1429, %v1430
      %v1432 = vand.u32 %v1431, 4294901760
      %1433 = vmatpush1.msra.mxu0 %v1432
      %v1434 = vand.u32 %v1165, 4294901760
      %v1435 = vsub.f32 %v1165, %v1434
      %v1436 = vand.u32 %v1435, 4294901760
      %v1437 = vsub.f32 %v1435, %v1436
      %v1438 = vand.u32 %v1437, 4294901760
      %1439 = vmatprep.subr.mxu0 %v1438
      %v1440 = vand.u32 %v1164, 4294901760
      %v1441 = vsub.f32 %v1164, %v1440
      %v1442 = vand.u32 %v1441, 4294901760
      %v1443 = vsub.f32 %v1441, %v1442
      %v1444 = vand.u32 %v1443, 4294901760
      %1445 = vmatpush1.msra.mxu0 %v1444
      %1446 = vmatprep.subr.mxu0 0.0
      %1447 = vmatpush1.msra.mxu0 0.0
      %1448 = vmatprep.subr.mxu0 0.0
      %1449 = vmatpush1.msra.mxu0 0.0
      %1450 = vmatprep.subr.mxu0 0.0
      %1451 = vmatpush1.msra.mxu0 0.0
      %1452 = vmatprep.subr.mxu0 0.0
      %1453 = vmatpush1.msra.mxu0 0.0
      %1454 = vmatprep.subr.mxu0 0.0
      %1455 = vmatpush1.msra.mxu0 0.0
      %1456 = vmatprep.subr.mxu0 0.0
      %1457 = vmatpush1.msra.mxu0 0.0
      %1458 = vmatprep.subr.mxu0 0.0
      %1459 = vmatpush1.msra.mxu0 0.0
      %1460 = vmatprep.subr.mxu0 0.0
      %1461 = vmatpush1.msra.mxu0 0.0
      %1462 = vmatprep.subr.mxu0 0.0
      %1463 = vmatpush1.msra.mxu0 0.0
      %1464 = vmatprep.subr.mxu0 0.0
      %1465 = vmatpush1.msra.mxu0 0.0
      %1466 = vmatprep.subr.mxu0 0.0
      %1467 = vmatpush1.msra.mxu0 0.0
      %1468 = vmatprep.subr.mxu0 0.0
      %1469 = vmatpush1.msra.mxu0 0.0
      %1470 = vmatprep.subr.mxu0 0.0
      %1471 = vmatpush1.msra.mxu0 0.0
      %1472 = vmatprep.subr.mxu0 0.0
      %1473 = vmatpush1.msra.mxu0 0.0
      %1474 = vmatprep.subr.mxu0 0.0
      %1475 = vmatpush1.msra.mxu0 0.0
      %1476 = vmatprep.subr.mxu0 0.0
      %1477 = vmatpush1.msra.mxu0 0.0
      %1478 = vmatprep.subr.mxu0 0.0
      %1479 = vmatpush1.msra.mxu0 0.0
      %1480 = vmatprep.subr.mxu0 0.0
      %1481 = vmatpush1.msra.mxu0 0.0
      %1482 = vmatprep.subr.mxu0 0.0
      %1483 = vmatpush1.msra.mxu0 0.0
      %1484 = vmatprep.subr.mxu0 0.0
      %1485 = vmatpush1.msra.mxu0 0.0
      %1486 = vmatprep.subr.mxu0 0.0
      %1487 = vmatpush1.msra.mxu0 0.0
      %1488 = vmatprep.mubr.f32.mxu0 0.0
      %v1489 = vand.u32 %v1186, 4294901760
      %1490 = vmatmul.mubr.f32.gmra.mrb[0].mxu0 %v1489
      %v1491 = vpop.f32.mrb[0].mxu0
      %v1492 = vadd.f32 %v1288, %v1491
      %v1493 = vpop.f32.mrb[0].mxu0
      %v1494 = vadd.f32 %v1290, %v1493
      %1495 = vmatprep.mubr.f32.mxu0 0.0
      %v1496 = vand.u32 %v1189, 4294901760
      %1497 = vmatmul.mubr.f32.gmra.mrb[0].mxu0 %v1496
      %v1498 = vpop.f32.mrb[0].mxu0
      %v1499 = vadd.f32 %v1299, %v1498
      %v1500 = vpop.f32.mrb[0].mxu0
      %v1501 = vadd.f32 %v1301, %v1500
      %1502 = vmatprep.mubr.f32.mxu0 0.0
      %v1503 = vand.u32 %v1192, 4294901760
      %1504 = vmatmul.mubr.f32.gmra.mrb[0].mxu0 %v1503
      %v1505 = vpop.f32.mrb[0].mxu0
      %v1506 = vadd.f32 %v1310, %v1505
      %v1507 = vpop.f32.mrb[0].mxu0
      %v1508 = vadd.f32 %v1312, %v1507
      %1509 = vdwg.mxu0
      %v1510 = vand.u32 %v1145, 4294901760
      %v1511 = vsub.f32 %v1145, %v1510
      %1512 = vmatprep.subr.mxu0 %v1511
      %v1513 = vand.u32 %v1144, 4294901760
      %v1514 = vsub.f32 %v1144, %v1513
      %1515 = vmatpush1.msra.mxu0 %v1514
      %v1516 = vand.u32 %v1147, 4294901760
      %v1517 = vsub.f32 %v1147, %v1516
      %1518 = vmatprep.subr.mxu0 %v1517
      %v1519 = vand.u32 %v1146, 4294901760
      %v1520 = vsub.f32 %v1146, %v1519
      %1521 = vmatpush1.msra.mxu0 %v1520
      %v1522 = vand.u32 %v1149, 4294901760
      %v1523 = vsub.f32 %v1149, %v1522
      %1524 = vmatprep.subr.mxu0 %v1523
      %v1525 = vand.u32 %v1148, 4294901760
      %v1526 = vsub.f32 %v1148, %v1525
      %1527 = vmatpush1.msra.mxu0 %v1526
      %v1528 = vand.u32 %v1151, 4294901760
      %v1529 = vsub.f32 %v1151, %v1528
      %1530 = vmatprep.subr.mxu0 %v1529
      %v1531 = vand.u32 %v1150, 4294901760
      %v1532 = vsub.f32 %v1150, %v1531
      %1533 = vmatpush1.msra.mxu0 %v1532
      %v1534 = vand.u32 %v1153, 4294901760
      %v1535 = vsub.f32 %v1153, %v1534
      %1536 = vmatprep.subr.mxu0 %v1535
      %v1537 = vand.u32 %v1152, 4294901760
      %v1538 = vsub.f32 %v1152, %v1537
      %1539 = vmatpush1.msra.mxu0 %v1538
      %v1540 = vand.u32 %v1155, 4294901760
      %v1541 = vsub.f32 %v1155, %v1540
      %1542 = vmatprep.subr.mxu0 %v1541
      %v1543 = vand.u32 %v1154, 4294901760
      %v1544 = vsub.f32 %v1154, %v1543
      %1545 = vmatpush1.msra.mxu0 %v1544
      %v1546 = vand.u32 %v1157, 4294901760
      %v1547 = vsub.f32 %v1157, %v1546
      %1548 = vmatprep.subr.mxu0 %v1547
      %v1549 = vand.u32 %v1156, 4294901760
      %v1550 = vsub.f32 %v1156, %v1549
      %1551 = vmatpush1.msra.mxu0 %v1550
      %v1552 = vand.u32 %v1159, 4294901760
      %v1553 = vsub.f32 %v1159, %v1552
      %1554 = vmatprep.subr.mxu0 %v1553
      %v1555 = vand.u32 %v1158, 4294901760
      %v1556 = vsub.f32 %v1158, %v1555
      %1557 = vmatpush1.msra.mxu0 %v1556
      %v1558 = vand.u32 %v1161, 4294901760
      %v1559 = vsub.f32 %v1161, %v1558
      %1560 = vmatprep.subr.mxu0 %v1559
      %v1561 = vand.u32 %v1160, 4294901760
      %v1562 = vsub.f32 %v1160, %v1561
      %1563 = vmatpush1.msra.mxu0 %v1562
      %v1564 = vand.u32 %v1163, 4294901760
      %v1565 = vsub.f32 %v1163, %v1564
      %1566 = vmatprep.subr.mxu0 %v1565
      %v1567 = vand.u32 %v1162, 4294901760
      %v1568 = vsub.f32 %v1162, %v1567
      %1569 = vmatpush1.msra.mxu0 %v1568
      %v1570 = vand.u32 %v1165, 4294901760
      %v1571 = vsub.f32 %v1165, %v1570
      %1572 = vmatprep.subr.mxu0 %v1571
      %v1573 = vand.u32 %v1164, 4294901760
      %v1574 = vsub.f32 %v1164, %v1573
      %1575 = vmatpush1.msra.mxu0 %v1574
      %1576 = vmatprep.subr.mxu0 0.0
      %1577 = vmatpush1.msra.mxu0 0.0
      %1578 = vmatprep.subr.mxu0 0.0
      %1579 = vmatpush1.msra.mxu0 0.0
      %1580 = vmatprep.subr.mxu0 0.0
      %1581 = vmatpush1.msra.mxu0 0.0
      %1582 = vmatprep.subr.mxu0 0.0
      %1583 = vmatpush1.msra.mxu0 0.0
      %1584 = vmatprep.subr.mxu0 0.0
      %1585 = vmatpush1.msra.mxu0 0.0
      %1586 = vmatprep.subr.mxu0 0.0
      %1587 = vmatpush1.msra.mxu0 0.0
      %1588 = vmatprep.subr.mxu0 0.0
      %1589 = vmatpush1.msra.mxu0 0.0
      %1590 = vmatprep.subr.mxu0 0.0
      %1591 = vmatpush1.msra.mxu0 0.0
      %1592 = vmatprep.subr.mxu0 0.0
      %1593 = vmatpush1.msra.mxu0 0.0
      %1594 = vmatprep.subr.mxu0 0.0
      %1595 = vmatpush1.msra.mxu0 0.0
      %1596 = vmatprep.subr.mxu0 0.0
      %1597 = vmatpush1.msra.mxu0 0.0
      %1598 = vmatprep.subr.mxu0 0.0
      %1599 = vmatpush1.msra.mxu0 0.0
      %1600 = vmatprep.subr.mxu0 0.0
      %1601 = vmatpush1.msra.mxu0 0.0
      %1602 = vmatprep.subr.mxu0 0.0
      %1603 = vmatpush1.msra.mxu0 0.0
      %1604 = vmatprep.subr.mxu0 0.0
      %1605 = vmatpush1.msra.mxu0 0.0
      %1606 = vmatprep.subr.mxu0 0.0
      %1607 = vmatpush1.msra.mxu0 0.0
      %1608 = vmatprep.subr.mxu0 0.0
      %1609 = vmatpush1.msra.mxu0 0.0
      %1610 = vmatprep.subr.mxu0 0.0
      %1611 = vmatpush1.msra.mxu0 0.0
      %1612 = vmatprep.subr.mxu0 0.0
      %1613 = vmatpush1.msra.mxu0 0.0
      %1614 = vmatprep.subr.mxu0 0.0
      %1615 = vmatpush1.msra.mxu0 0.0
      %1616 = vmatprep.subr.mxu0 0.0
      %1617 = vmatpush1.msra.mxu0 0.0
      %1618 = vmatprep.mubr.f32.mxu0 0.0
      %v1619 = vand.u32 %v1186, 4294901760
      %v1620 = vsub.f32 %v1186, %v1619
      %1621 = vmatmul.mubr.f32.gmra.mrb[0].mxu0 %v1620
      %v1622 = vpop.f32.mrb[0].mxu0
      %v1623 = vadd.f32 %v1492, %v1622
      %v1624 = vpop.f32.mrb[0].mxu0
      %v1625 = vadd.f32 %v1494, %v1624
      %1626 = vmatprep.mubr.f32.mxu0 0.0
      %v1627 = vand.u32 %v1189, 4294901760
      %v1628 = vsub.f32 %v1189, %v1627
      %1629 = vmatmul.mubr.f32.gmra.mrb[0].mxu0 %v1628
      %v1630 = vpop.f32.mrb[0].mxu0
      %v1631 = vadd.f32 %v1499, %v1630
      %v1632 = vpop.f32.mrb[0].mxu0
      %v1633 = vadd.f32 %v1501, %v1632
      %1634 = vmatprep.mubr.f32.mxu0 0.0
      %v1635 = vand.u32 %v1192, 4294901760
      %v1636 = vsub.f32 %v1192, %v1635
      %1637 = vmatmul.mubr.f32.gmra.mrb[0].mxu0 %v1636
      %v1638 = vpop.f32.mrb[0].mxu0
      %v1639 = vadd.f32 %v1506, %v1638
      %v1640 = vpop.f32.mrb[0].mxu0
      %v1641 = vadd.f32 %v1508, %v1640
      %1642 = vdwg.mxu0
      %v1643 = vand.u32 %v1145, 4294901760
      %1644 = vmatprep.subr.mxu0 %v1643
      %v1645 = vand.u32 %v1144, 4294901760
      %1646 = vmatpush1.msra.mxu0 %v1645
      %v1647 = vand.u32 %v1147, 4294901760
      %1648 = vmatprep.subr.mxu0 %v1647
      %v1649 = vand.u32 %v1146, 4294901760
      %1650 = vmatpush1.msra.mxu0 %v1649
      %v1651 = vand.u32 %v1149, 4294901760
      %1652 = vmatprep.subr.mxu0 %v1651
      %v1653 = vand.u32 %v1148, 4294901760
      %1654 = vmatpush1.msra.mxu0 %v1653
      %v1655 = vand.u32 %v1151, 4294901760
      %1656 = vmatprep.subr.mxu0 %v1655
      %v1657 = vand.u32 %v1150, 4294901760
      %1658 = vmatpush1.msra.mxu0 %v1657
      %v1659 = vand.u32 %v1153, 4294901760
      %1660 = vmatprep.subr.mxu0 %v1659
      %v1661 = vand.u32 %v1152, 4294901760
      %1662 = vmatpush1.msra.mxu0 %v1661
      %v1663 = vand.u32 %v1155, 4294901760
      %1664 = vmatprep.subr.mxu0 %v1663
      %v1665 = vand.u32 %v1154, 4294901760
      %1666 = vmatpush1.msra.mxu0 %v1665
      %v1667 = vand.u32 %v1157, 4294901760
      %1668 = vmatprep.subr.mxu0 %v1667
      %v1669 = vand.u32 %v1156, 4294901760
      %1670 = vmatpush1.msra.mxu0 %v1669
      %v1671 = vand.u32 %v1159, 4294901760
      %1672 = vmatprep.subr.mxu0 %v1671
      %v1673 = vand.u32 %v1158, 4294901760
      %1674 = vmatpush1.msra.mxu0 %v1673
      %v1675 = vand.u32 %v1161, 4294901760
      %1676 = vmatprep.subr.mxu0 %v1675
      %v1677 = vand.u32 %v1160, 4294901760
      %1678 = vmatpush1.msra.mxu0 %v1677
      %v1679 = vand.u32 %v1163, 4294901760
      %1680 = vmatprep.subr.mxu0 %v1679
      %v1681 = vand.u32 %v1162, 4294901760
      %1682 = vmatpush1.msra.mxu0 %v1681
      %v1683 = vand.u32 %v1165, 4294901760
      %1684 = vmatprep.subr.mxu0 %v1683
      %v1685 = vand.u32 %v1164, 4294901760
      %1686 = vmatpush1.msra.mxu0 %v1685
      %1687 = vmatprep.subr.mxu0 0.0
      %1688 = vmatpush1.msra.mxu0 0.0
      %1689 = vmatprep.subr.mxu0 0.0
      %1690 = vmatpush1.msra.mxu0 0.0
      %1691 = vmatprep.subr.mxu0 0.0
      %1692 = vmatpush1.msra.mxu0 0.0
      %1693 = vmatprep.subr.mxu0 0.0
      %1694 = vmatpush1.msra.mxu0 0.0
      %1695 = vmatprep.subr.mxu0 0.0
      %1696 = vmatpush1.msra.mxu0 0.0
      %1697 = vmatprep.subr.mxu0 0.0
      %1698 = vmatpush1.msra.mxu0 0.0
      %1699 = vmatprep.subr.mxu0 0.0
      %1700 = vmatpush1.msra.mxu0 0.0
      %1701 = vmatprep.subr.mxu0 0.0
      %1702 = vmatpush1.msra.mxu0 0.0
      %1703 = vmatprep.subr.mxu0 0.0
      %1704 = vmatpush1.msra.mxu0 0.0
      %1705 = vmatprep.subr.mxu0 0.0
      %1706 = vmatpush1.msra.mxu0 0.0
      %1707 = vmatprep.subr.mxu0 0.0
      %1708 = vmatpush1.msra.mxu0 0.0
      %1709 = vmatprep.subr.mxu0 0.0
      %1710 = vmatpush1.msra.mxu0 0.0
      %1711 = vmatprep.subr.mxu0 0.0
      %1712 = vmatpush1.msra.mxu0 0.0
      %1713 = vmatprep.subr.mxu0 0.0
      %1714 = vmatpush1.msra.mxu0 0.0
      %1715 = vmatprep.subr.mxu0 0.0
      %1716 = vmatpush1.msra.mxu0 0.0
      %1717 = vmatprep.subr.mxu0 0.0
      %1718 = vmatpush1.msra.mxu0 0.0
      %1719 = vmatprep.subr.mxu0 0.0
      %1720 = vmatpush1.msra.mxu0 0.0
      %1721 = vmatprep.subr.mxu0 0.0
      %1722 = vmatpush1.msra.mxu0 0.0
      %1723 = vmatprep.subr.mxu0 0.0
      %1724 = vmatpush1.msra.mxu0 0.0
      %1725 = vmatprep.subr.mxu0 0.0
      %1726 = vmatpush1.msra.mxu0 0.0
      %1727 = vmatprep.subr.mxu0 0.0
      %1728 = vmatpush1.msra.mxu0 0.0
      %1729 = vmatprep.mubr.f32.mxu0 0.0
      %v1730 = vand.u32 %v1186, 4294901760
      %v1731 = vsub.f32 %v1186, %v1730
      %v1732 = vand.u32 %v1731, 4294901760
      %1733 = vmatmul.mubr.f32.gmra.mrb[0].mxu0 %v1732
      %v1734 = vpop.f32.mrb[0].mxu0
      %v1735 = vadd.f32 %v1623, %v1734
      %v1736 = vpop.f32.mrb[0].mxu0
      %v1737 = vadd.f32 %v1625, %v1736
      %1738 = vmatprep.mubr.f32.mxu0 0.0
      %v1739 = vand.u32 %v1189, 4294901760
      %v1740 = vsub.f32 %v1189, %v1739
      %v1741 = vand.u32 %v1740, 4294901760
      %1742 = vmatmul.mubr.f32.gmra.mrb[0].mxu0 %v1741
      %v1743 = vpop.f32.mrb[0].mxu0
      %v1744 = vadd.f32 %v1631, %v1743
      %v1745 = vpop.f32.mrb[0].mxu0
      %v1746 = vadd.f32 %v1633, %v1745
      %1747 = vmatprep.mubr.f32.mxu0 0.0
      %v1748 = vand.u32 %v1192, 4294901760
      %v1749 = vsub.f32 %v1192, %v1748
      %v1750 = vand.u32 %v1749, 4294901760
      %1751 = vmatmul.mubr.f32.gmra.mrb[0].mxu0 %v1750
      %v1752 = vpop.f32.mrb[0].mxu0
      %v1753 = vadd.f32 %v1639, %v1752
      %v1754 = vpop.f32.mrb[0].mxu0
      %v1755 = vadd.f32 %v1641, %v1754
      %1756 = vdwg.mxu0
      %v1757 = vand.u32 %v1145, 4294901760
      %v1758 = vsub.f32 %v1145, %v1757
      %v1759 = vand.u32 %v1758, 4294901760
      %1760 = vmatprep.subr.mxu0 %v1759
      %v1761 = vand.u32 %v1144, 4294901760
      %v1762 = vsub.f32 %v1144, %v1761
      %v1763 = vand.u32 %v1762, 4294901760
      %1764 = vmatpush1.msra.mxu0 %v1763
      %v1765 = vand.u32 %v1147, 4294901760
      %v1766 = vsub.f32 %v1147, %v1765
      %v1767 = vand.u32 %v1766, 4294901760
      %1768 = vmatprep.subr.mxu0 %v1767
      %v1769 = vand.u32 %v1146, 4294901760
      %v1770 = vsub.f32 %v1146, %v1769
      %v1771 = vand.u32 %v1770, 4294901760
      %1772 = vmatpush1.msra.mxu0 %v1771
      %v1773 = vand.u32 %v1149, 4294901760
      %v1774 = vsub.f32 %v1149, %v1773
      %v1775 = vand.u32 %v1774, 4294901760
      %1776 = vmatprep.subr.mxu0 %v1775
      %v1777 = vand.u32 %v1148, 4294901760
      %v1778 = vsub.f32 %v1148, %v1777
      %v1779 = vand.u32 %v1778, 4294901760
      %1780 = vmatpush1.msra.mxu0 %v1779
      %v1781 = vand.u32 %v1151, 4294901760
      %v1782 = vsub.f32 %v1151, %v1781
      %v1783 = vand.u32 %v1782, 4294901760
      %1784 = vmatprep.subr.mxu0 %v1783
      %v1785 = vand.u32 %v1150, 4294901760
      %v1786 = vsub.f32 %v1150, %v1785
      %v1787 = vand.u32 %v1786, 4294901760
      %1788 = vmatpush1.msra.mxu0 %v1787
      %v1789 = vand.u32 %v1153, 4294901760
      %v1790 = vsub.f32 %v1153, %v1789
      %v1791 = vand.u32 %v1790, 4294901760
      %1792 = vmatprep.subr.mxu0 %v1791
      %v1793 = vand.u32 %v1152, 4294901760
      %v1794 = vsub.f32 %v1152, %v1793
      %v1795 = vand.u32 %v1794, 4294901760
      %1796 = vmatpush1.msra.mxu0 %v1795
      %v1797 = vand.u32 %v1155, 4294901760
      %v1798 = vsub.f32 %v1155, %v1797
      %v1799 = vand.u32 %v1798, 4294901760
      %1800 = vmatprep.subr.mxu0 %v1799
      %v1801 = vand.u32 %v1154, 4294901760
      %v1802 = vsub.f32 %v1154, %v1801
      %v1803 = vand.u32 %v1802, 4294901760
      %1804 = vmatpush1.msra.mxu0 %v1803
      %v1805 = vand.u32 %v1157, 4294901760
      %v1806 = vsub.f32 %v1157, %v1805
      %v1807 = vand.u32 %v1806, 4294901760
      %1808 = vmatprep.subr.mxu0 %v1807
      %v1809 = vand.u32 %v1156, 4294901760
      %v1810 = vsub.f32 %v1156, %v1809
      %v1811 = vand.u32 %v1810, 4294901760
      %1812 = vmatpush1.msra.mxu0 %v1811
      %v1813 = vand.u32 %v1159, 4294901760
      %v1814 = vsub.f32 %v1159, %v1813
      %v1815 = vand.u32 %v1814, 4294901760
      %1816 = vmatprep.subr.mxu0 %v1815
      %v1817 = vand.u32 %v1158, 4294901760
      %v1818 = vsub.f32 %v1158, %v1817
      %v1819 = vand.u32 %v1818, 4294901760
      %1820 = vmatpush1.msra.mxu0 %v1819
      %v1821 = vand.u32 %v1161, 4294901760
      %v1822 = vsub.f32 %v1161, %v1821
      %v1823 = vand.u32 %v1822, 4294901760
      %1824 = vmatprep.subr.mxu0 %v1823
      %v1825 = vand.u32 %v1160, 4294901760
      %v1826 = vsub.f32 %v1160, %v1825
      %v1827 = vand.u32 %v1826, 4294901760
      %1828 = vmatpush1.msra.mxu0 %v1827
      %v1829 = vand.u32 %v1163, 4294901760
      %v1830 = vsub.f32 %v1163, %v1829
      %v1831 = vand.u32 %v1830, 4294901760
      %1832 = vmatprep.subr.mxu0 %v1831
      %v1833 = vand.u32 %v1162, 4294901760
      %v1834 = vsub.f32 %v1162, %v1833
      %v1835 = vand.u32 %v1834, 4294901760
      %1836 = vmatpush1.msra.mxu0 %v1835
      %v1837 = vand.u32 %v1165, 4294901760
      %v1838 = vsub.f32 %v1165, %v1837
      %v1839 = vand.u32 %v1838, 4294901760
      %1840 = vmatprep.subr.mxu0 %v1839
      %v1841 = vand.u32 %v1164, 4294901760
      %v1842 = vsub.f32 %v1164, %v1841
      %v1843 = vand.u32 %v1842, 4294901760
      %1844 = vmatpush1.msra.mxu0 %v1843
      %1845 = vmatprep.subr.mxu0 0.0
      %1846 = vmatpush1.msra.mxu0 0.0
      %1847 = vmatprep.subr.mxu0 0.0
      %1848 = vmatpush1.msra.mxu0 0.0
      %1849 = vmatprep.subr.mxu0 0.0
      %1850 = vmatpush1.msra.mxu0 0.0
      %1851 = vmatprep.subr.mxu0 0.0
      %1852 = vmatpush1.msra.mxu0 0.0
      %1853 = vmatprep.subr.mxu0 0.0
      %1854 = vmatpush1.msra.mxu0 0.0
      %1855 = vmatprep.subr.mxu0 0.0
      %1856 = vmatpush1.msra.mxu0 0.0
      %1857 = vmatprep.subr.mxu0 0.0
      %1858 = vmatpush1.msra.mxu0 0.0
      %1859 = vmatprep.subr.mxu0 0.0
      %1860 = vmatpush1.msra.mxu0 0.0
      %1861 = vmatprep.subr.mxu0 0.0
      %1862 = vmatpush1.msra.mxu0 0.0
      %1863 = vmatprep.subr.mxu0 0.0
      %1864 = vmatpush1.msra.mxu0 0.0
      %1865 = vmatprep.subr.mxu0 0.0
      %1866 = vmatpush1.msra.mxu0 0.0
      %1867 = vmatprep.subr.mxu0 0.0
      %1868 = vmatpush1.msra.mxu0 0.0
      %1869 = vmatprep.subr.mxu0 0.0
      %1870 = vmatpush1.msra.mxu0 0.0
      %1871 = vmatprep.subr.mxu0 0.0
      %1872 = vmatpush1.msra.mxu0 0.0
      %1873 = vmatprep.subr.mxu0 0.0
      %1874 = vmatpush1.msra.mxu0 0.0
      %1875 = vmatprep.subr.mxu0 0.0
      %1876 = vmatpush1.msra.mxu0 0.0
      %1877 = vmatprep.subr.mxu0 0.0
      %1878 = vmatpush1.msra.mxu0 0.0
      %1879 = vmatprep.subr.mxu0 0.0
      %1880 = vmatpush1.msra.mxu0 0.0
      %1881 = vmatprep.subr.mxu0 0.0
      %1882 = vmatpush1.msra.mxu0 0.0
      %1883 = vmatprep.subr.mxu0 0.0
      %1884 = vmatpush1.msra.mxu0 0.0
      %1885 = vmatprep.subr.mxu0 0.0
      %1886 = vmatpush1.msra.mxu0 0.0
      %1887 = vmatprep.mubr.f32.mxu0 0.0
      %v1888 = vand.u32 %v1186, 4294901760
      %1889 = vmatmul.mubr.f32.gmra.mrb[0].mxu0 %v1888
      %v1890 = vpop.f32.mrb[0].mxu0
      %v1891 = vadd.f32 %v1735, %v1890
      %v1892 = vpop.f32.mrb[0].mxu0
      %v1893 = vadd.f32 %v1737, %v1892
      %1894 = vmatprep.mubr.f32.mxu0 0.0
      %v1895 = vand.u32 %v1189, 4294901760
      %1896 = vmatmul.mubr.f32.gmra.mrb[0].mxu0 %v1895
      %v1897 = vpop.f32.mrb[0].mxu0
      %v1898 = vadd.f32 %v1744, %v1897
      %v1899 = vpop.f32.mrb[0].mxu0
      %v1900 = vadd.f32 %v1746, %v1899
      %1901 = vmatprep.mubr.f32.mxu0 0.0
      %v1902 = vand.u32 %v1192, 4294901760
      %1903 = vmatmul.mubr.f32.gmra.mrb[0].mxu0 %v1902
      %v1904 = vpop.f32.mrb[0].mxu0
      %v1905 = vadd.f32 %v1753, %v1904
      %v1906 = vpop.f32.mrb[0].mxu0
      %v1907 = vadd.f32 %v1755, %v1906
      %1908 = vdwg.mxu0
      %v1909 = vand.u32 %v1145, 4294901760
      %1910 = vmatprep.subr.mxu0 %v1909
      %v1911 = vand.u32 %v1144, 4294901760
      %1912 = vmatpush1.msra.mxu0 %v1911
      %v1913 = vand.u32 %v1147, 4294901760
      %1914 = vmatprep.subr.mxu0 %v1913
      %v1915 = vand.u32 %v1146, 4294901760
      %1916 = vmatpush1.msra.mxu0 %v1915
      %v1917 = vand.u32 %v1149, 4294901760
      %1918 = vmatprep.subr.mxu0 %v1917
      %v1919 = vand.u32 %v1148, 4294901760
      %1920 = vmatpush1.msra.mxu0 %v1919
      %v1921 = vand.u32 %v1151, 4294901760
      %1922 = vmatprep.subr.mxu0 %v1921
      %v1923 = vand.u32 %v1150, 4294901760
      %1924 = vmatpush1.msra.mxu0 %v1923
      %v1925 = vand.u32 %v1153, 4294901760
      %1926 = vmatprep.subr.mxu0 %v1925
      %v1927 = vand.u32 %v1152, 4294901760
      %1928 = vmatpush1.msra.mxu0 %v1927
      %v1929 = vand.u32 %v1155, 4294901760
      %1930 = vmatprep.subr.mxu0 %v1929
      %v1931 = vand.u32 %v1154, 4294901760
      %1932 = vmatpush1.msra.mxu0 %v1931
      %v1933 = vand.u32 %v1157, 4294901760
      %1934 = vmatprep.subr.mxu0 %v1933
      %v1935 = vand.u32 %v1156, 4294901760
      %1936 = vmatpush1.msra.mxu0 %v1935
      %v1937 = vand.u32 %v1159, 4294901760
      %1938 = vmatprep.subr.mxu0 %v1937
      %v1939 = vand.u32 %v1158, 4294901760
      %1940 = vmatpush1.msra.mxu0 %v1939
      %v1941 = vand.u32 %v1161, 4294901760
      %1942 = vmatprep.subr.mxu0 %v1941
      %v1943 = vand.u32 %v1160, 4294901760
      %1944 = vmatpush1.msra.mxu0 %v1943
      %v1945 = vand.u32 %v1163, 4294901760
      %1946 = vmatprep.subr.mxu0 %v1945
      %v1947 = vand.u32 %v1162, 4294901760
      %1948 = vmatpush1.msra.mxu0 %v1947
      %v1949 = vand.u32 %v1165, 4294901760
      %1950 = vmatprep.subr.mxu0 %v1949
      %v1951 = vand.u32 %v1164, 4294901760
      %1952 = vmatpush1.msra.mxu0 %v1951
      %1953 = vmatprep.subr.mxu0 0.0
      %1954 = vmatpush1.msra.mxu0 0.0
      %1955 = vmatprep.subr.mxu0 0.0
      %1956 = vmatpush1.msra.mxu0 0.0
      %1957 = vmatprep.subr.mxu0 0.0
      %1958 = vmatpush1.msra.mxu0 0.0
      %1959 = vmatprep.subr.mxu0 0.0
      %1960 = vmatpush1.msra.mxu0 0.0
      %1961 = vmatprep.subr.mxu0 0.0
      %1962 = vmatpush1.msra.mxu0 0.0
      %1963 = vmatprep.subr.mxu0 0.0
      %1964 = vmatpush1.msra.mxu0 0.0
      %1965 = vmatprep.subr.mxu0 0.0
      %1966 = vmatpush1.msra.mxu0 0.0
      %1967 = vmatprep.subr.mxu0 0.0
      %1968 = vmatpush1.msra.mxu0 0.0
      %1969 = vmatprep.subr.mxu0 0.0
      %1970 = vmatpush1.msra.mxu0 0.0
      %1971 = vmatprep.subr.mxu0 0.0
      %1972 = vmatpush1.msra.mxu0 0.0
      %1973 = vmatprep.subr.mxu0 0.0
      %1974 = vmatpush1.msra.mxu0 0.0
      %1975 = vmatprep.subr.mxu0 0.0
      %1976 = vmatpush1.msra.mxu0 0.0
      %1977 = vmatprep.subr.mxu0 0.0
      %1978 = vmatpush1.msra.mxu0 0.0
      %1979 = vmatprep.subr.mxu0 0.0
      %1980 = vmatpush1.msra.mxu0 0.0
      %1981 = vmatprep.subr.mxu0 0.0
      %1982 = vmatpush1.msra.mxu0 0.0
      %1983 = vmatprep.subr.mxu0 0.0
      %1984 = vmatpush1.msra.mxu0 0.0
      %1985 = vmatprep.subr.mxu0 0.0
      %1986 = vmatpush1.msra.mxu0 0.0
      %1987 = vmatprep.subr.mxu0 0.0
      %1988 = vmatpush1.msra.mxu0 0.0
      %1989 = vmatprep.subr.mxu0 0.0
      %1990 = vmatpush1.msra.mxu0 0.0
      %1991 = vmatprep.subr.mxu0 0.0
      %1992 = vmatpush1.msra.mxu0 0.0
      %1993 = vmatprep.subr.mxu0 0.0
      %1994 = vmatpush1.msra.mxu0 0.0
      %1995 = vmatprep.mubr.f32.mxu0 0.0
      %v1996 = vand.u32 %v1186, 4294901760
      %1997 = vmatmul.mubr.f32.gmra.mrb[0].mxu0 %v1996
      %v1998 = vpop.f32.mrb[0].mxu0
      %v1999 = vadd.f32 %v1891, %v1998
      %v2000 = vpop.f32.mrb[0].mxu0
      %v2001 = vadd.f32 %v1893, %v2000
      %2002 = vmatprep.mubr.f32.mxu0 0.0
      %v2003 = vand.u32 %v1189, 4294901760
      %2004 = vmatmul.mubr.f32.gmra.mrb[0].mxu0 %v2003
      %v2005 = vpop.f32.mrb[0].mxu0
      %v2006 = vadd.f32 %v1898, %v2005
      %v2007 = vpop.f32.mrb[0].mxu0
      %v2008 = vadd.f32 %v1900, %v2007
      %2009 = vmatprep.mubr.f32.mxu0 0.0
      %v2010 = vand.u32 %v1192, 4294901760
      %2011 = vmatmul.mubr.f32.gmra.mrb[0].mxu0 %v2010
      %v2012 = vpop.f32.mrb[0].mxu0
      %v2013 = vadd.f32 %v1905, %v2012
      %v2014 = vpop.f32.mrb[0].mxu0
      %v2015 = vadd.f32 %v1907, %v2014
      %2016 = vdwg.mxu0
      %v2017 = vmax.f32 %v1999, 0.0
      %v2018 = vmax.f32 %v2001, 0.0
      %v2019 = vmax.f32 %v2006, 0.0
      %v2020 = vmax.f32 %v2008, 0.0
      %v2021 = vmax.f32 %v2013, 0.0
      %v2022 = vmax.f32 %v2015, 0.0
      %2023 = vst [vmem:[%s278] sm:$0xff] %v2017
      %2024 = vst [vmem:[%s278 + $0x8] sm:$0xff] %v2018
      %2025 = vst [vmem:[%s278 + $0x10] sm:$0xff] %v2019
      %2026 = vst [vmem:[%s278 + $0x18] sm:$0xff] %v2020
      %2027 = vst [vmem:[%s278 + $0x20] sm:$0xf] %v2021
      %2028 = vst [vmem:[%s278 + $0x28] sm:$0xf] %v2022
      %p2029 = scmp.lt.s32.totalorder %s18, 1
      %s2030 = scalar_select %p2029, %s18, 1
      %s2031 = smul.addr %s2030, 6
      %s2032 = smul.addr %s2031, 8
      %s2033 = scalar_lea.vmem %s7, %s2032
      // Predicated region
      $region49: #{inception_forward.1} parent=47 // pred_check
        %p2034 = pneg %p188
      $region50: #{inception_forward.1} parent=47 // pred_check_branch
        %2036 = sbr.rel (%p2034) target = $region52
      $region51: #{inception_forward.1} parent=47 // pred_region
        _
      $region52: #{inception_forward.1} parent=47 // pred_fallthru
        _
    $region48: #{inception_forward.1} parent=5 // pred_fallthru
      _
    %p2037 = scmp.le.s32.totalorder 2, %s13
    // Predicated region
    $region53: #{inception_forward.1} parent=5 // pred_check
      %p2038 = pneg %p2037
    $region54: #{inception_forward.1} parent=5 // pred_check_branch
      %2040 = sbr.rel (%p2038) target = $region56
    $region55: #{inception_forward.1} parent=5 // pred_region
      %s2041 = ssub.s32 %s13, 2
      // Predicated region
      $region57: #{inception_forward.1} parent=55 // pred_check
        %p2042 = pneg %p194
      $region58: #{inception_forward.1} parent=55 // pred_check_branch
        %2044 = sbr.rel (%p2042) target = $region60
      $region59: #{inception_forward.1} parent=55 // pred_region
        %p2045 = scmp.lt.s32.totalorder %s19, 1
        %s2046 = scalar_select %p2045, %s19, 1
        %s2047 = smul.addr %s2046, 6
        %s2048 = smul.addr %s2047, 8
        %s2049 = scalar_lea.vmem %s7, %s2048
      $region60: #{inception_forward.1} parent=55 // pred_fallthru
        _
    $region56: #{inception_forward.1} parent=5 // pred_fallthru
      _
  $region6: #{inception_forward.1} parent=0 // loop_footer
    %s17 = sadd.s32 1, %s13
  $region7: #{inception_forward.1} parent=0 // loop_footer_branch
    %12 = sbr.rel target = $region3
  $region8: #{inception_forward.1} parent=0 // loop_exit
    _

</llo_original>
